<compile_context>
chip_gen: v7x
topology: tpu7x:2x2x1
jax: 0.10.0
libtpu: 0.0.40
codegen_flags: <defaults>
</compile_context>

<pallas_src>
import jax
import jax.numpy as jnp
from jax.experimental import pallas as pl
from jax.experimental.pallas import tpu as pltpu

# ---- small, module-consistent hyperparameters (d_ff = 4*d_model, d_k = d_v) ----
B = 2          # batch
S = 8          # sequence length
D = 32         # d_model
H = 2          # n_heads
DK = 16        # d_k = d_v
DFF = D * 4    # d_ff (= 128 -> fits one 128-lane slab row)
HK = H * DK    # n_heads * d_k
EPS = 1e-5     # nn.LayerNorm default eps
OUT_LANES = 128  # lane-dense padded width of the final output

# rows of the packed (16, 128) parameter slab
ROW_BQ = 0            # rows 0..H-1   : per-head q bias (pre-scaled by 1/sqrt(d_k)), lanes [0:DK]
ROW_BK = H            # rows H..2H-1  : per-head k bias, lanes [0:DK]
ROW_BV = 2 * H        # rows 2H..3H-1 : per-head v bias, lanes [0:DK]
ROW_BO = 3 * H        # output-projection bias, lanes [0:D]
ROW_GAMMA = 3 * H + 1  # LayerNorm weight, lanes [0:D]
ROW_BETA = 3 * H + 2   # LayerNorm bias,   lanes [0:D]
ROW_B1 = 3 * H + 3     # fc1 bias, lanes [0:DFF]
ROW_B2 = 3 * H + 4     # fc2 bias (zero-padded to OUT_LANES), lanes [0:OUT_LANES]
PSLAB_ROWS = 16


def _erf(z):
    # Abramowitz & Stegun 7.1.26 rational approximation of erf, |abs err| < 1.5e-7.
    a1, a2, a3, a4, a5 = 0.254829592, -0.284496736, 1.421413741, -1.453152027, 1.061405429
    p = 0.3275911
    az = jnp.abs(z)
    t = 1.0 / (1.0 + p * az)
    poly = ((((a5 * t + a4) * t + a3) * t + a2) * t + a1) * t
    e = 1.0 - poly * jnp.exp(-az * az)
    return jnp.where(z >= 0, e, -e)


def _gelu_exact(x):
    # F.gelu default: 0.5 * x * (1 + erf(x / sqrt(2)))
    return 0.5 * x * (1.0 + _erf(x * jnp.float32(0.7071067811865476)))


def encoder_layer_kernel(
    x_ref,       # (B, S, D)        f32 inputs
    bias_ref,    # (B, S, S)        f32 additive attention bias (0 / -1e9)
    wqkv_ref,    # (3*H, D, DK)     [scaled q heads | k heads | v heads]
    wo_ref,      # (HK, D)          output projection
    w1_ref,      # (D, DFF)         fc1
    w2_ref,      # (DFF, OUT_LANES) fc2, zero-padded columns [D:OUT_LANES]
    pslab_ref,   # (PSLAB_ROWS, 128) packed small params (biases / gamma / beta)
    out_ref,     # (B*S, OUT_LANES) lane-dense encoder output (cols [0:D] valid)
    attn_ref,    # (H, B, S, S)     attention probabilities (head-major)
):
    x2 = x_ref[...].reshape(B * S, D)          # leading-dim reshape (S tile-aligned)
    attn_bias = bias_ref[...]                  # (B, S, S)

    attn_out = None
    for h in range(H):                         # H = 2, fully unrolled
        bq = pslab_ref[ROW_BQ + h:ROW_BQ + h + 1, :DK]   # (1, DK), lane-0 aligned
        bk = pslab_ref[ROW_BK + h:ROW_BK + h + 1, :DK]
        bv = pslab_ref[ROW_BV + h:ROW_BV + h + 1, :DK]

        # per-head projections: each weight slab starts at lane 0 -> no result slicing
        qh = (jnp.dot(x2, wqkv_ref[h],         preferred_element_type=jnp.float32) + bq)
        kh = (jnp.dot(x2, wqkv_ref[H + h],     preferred_element_type=jnp.float32) + bk)
        vh = (jnp.dot(x2, wqkv_ref[2 * H + h], preferred_element_type=jnp.float32) + bv)
        qh = qh.reshape(B, S, DK)
        kh = kh.reshape(B, S, DK)
        vh = vh.reshape(B, S, DK)

        # scores already carry 1/sqrt(d_k) (folded into wq/bq); mask is additive
        scores = jnp.einsum("bqd,bkd->bqk", qh, kh,
                            preferred_element_type=jnp.float32) + attn_bias
        m = jnp.max(scores, axis=-1, keepdims=True)
        e = jnp.exp(scores - m)
        p = e / jnp.sum(e, axis=-1, keepdims=True)   # exact reciprocal: rows sum to 1

        # direct per-head store (static leading-dim index, no stack relayout)
        attn_ref[h] = p

        ctx = jnp.einsum("bqk,bkd->bqd", p, vh,
                         preferred_element_type=jnp.float32).reshape(B * S, DK)
        # per-head output projection = row slice of Wo (sublane slice at multiple of 8)
        contrib = jnp.dot(ctx, wo_ref[h * DK:(h + 1) * DK, :],
                          preferred_element_type=jnp.float32)
        attn_out = contrib if attn_out is None else attn_out + contrib

    # --- residual + LayerNorm ---
    bo = pslab_ref[ROW_BO:ROW_BO + 1, :D]
    gamma = pslab_ref[ROW_GAMMA:ROW_GAMMA + 1, :D]
    beta = pslab_ref[ROW_BETA:ROW_BETA + 1, :D]
    y = attn_out + bo + x2
    mu = jnp.mean(y, axis=-1, keepdims=True)
    var = jnp.mean((y - mu) ** 2, axis=-1, keepdims=True)
    ln = (y - mu) * jax.lax.rsqrt(var + EPS) * gamma + beta

    # --- position-wise feed-forward: fc2(gelu(fc1(x))) ---
    b1 = pslab_ref[ROW_B1:ROW_B1 + 1, :DFF]
    b2 = pslab_ref[ROW_B2:ROW_B2 + 1, :OUT_LANES]        # already zero-padded to 128
    h1 = jnp.dot(ln, w1_ref[...], preferred_element_type=jnp.float32) + b1
    h1 = _gelu_exact(h1)
    # fc2 columns padded to 128 -> (B*S, 128) result -> unmasked lane-dense store
    out_wide = jnp.dot(h1, w2_ref[...], preferred_element_type=jnp.float32) + b2
    out_ref[...] = out_wide


def encoder_layer(x, mask, params):
    """x: (B,S,D) f32, mask: (B,S,S) f32 (1.0 = masked). Returns (out, attn)."""
    (wq, bq, wk, bk, wv, bv, wo, bo, gamma, beta, w1, b1, w2, b2) = params

    inv_scale = 1.0 / jnp.sqrt(jnp.float32(DK))
    wq_s = wq * inv_scale                      # fold 1/sqrt(d_k) into the Q projection
    bq_s = bq * inv_scale

    # stack per-head projection weights so every head block starts at lane 0
    def heads(w):                              # (D, H*DK) -> (H, D, DK)
        return w.reshape(D, H, DK).transpose(1, 0, 2)

    wqkv = jnp.concatenate([heads(wq_s), heads(wk), heads(wv)], axis=0)  # (3H, D, DK)

    # zero-pad fc2 to 128 output columns -> lane-dense final matmul / store (free on MXU)
    w2_wide = jnp.zeros((DFF, OUT_LANES), jnp.float32).at[:, :D].set(w2)

    # pack all small (1, N) params into one zero-padded (16, 128) slab -> single DMA
    assert DFF <= 128 and D <= 128
    pslab = jnp.zeros((PSLAB_ROWS, 128), jnp.float32)

    def put(slab, row, vec):
        vec = vec.reshape(1, -1)
        return slab.at[row:row + 1, :vec.shape[1]].set(vec)

    for h in range(H):
        pslab = put(pslab, ROW_BQ + h, bq_s[:, h * DK:(h + 1) * DK])
        pslab = put(pslab, ROW_BK + h, bk[:, h * DK:(h + 1) * DK])
        pslab = put(pslab, ROW_BV + h, bv[:, h * DK:(h + 1) * DK])
    pslab = put(pslab, ROW_BO, bo)
    pslab = put(pslab, ROW_GAMMA, gamma)
    pslab = put(pslab, ROW_BETA, beta)
    pslab = put(pslab, ROW_B1, b1)
    pslab = put(pslab, ROW_B2, b2)             # lanes [D:128] stay zero = padded fc2 bias

    # masked_fill(mask, -1e9) expressed as an additive bias (identical softmax result
    # for any row with at least one unmasked key; fully-masked rows are degenerate)
    attn_bias = jnp.where(mask > 0.5, jnp.float32(-1e9), jnp.float32(0.0))

    inputs = (x, attn_bias, wqkv, wo, w1, w2_wide, pslab)
    vmem = pl.BlockSpec(memory_space=pltpu.MemorySpace.VMEM)

    # advisory cost estimate so XLA schedules sensibly around this ~microsecond kernel
    flops = (2 * B * S * D * 3 * HK              # per-head QKV projections
             + H * 2 * (2 * B * S * S * DK)      # scores + context
             + 2 * B * S * HK * D                # output projection
             + 2 * B * S * D * DFF               # fc1
             + 2 * B * S * DFF * OUT_LANES)      # fc2 (lane-padded)
    transcendentals = B * H * S * S + B * S * DFF
    bytes_accessed = (sum(int(a.size) for a in inputs) * 4
                      + (B * S * OUT_LANES + H * B * S * S) * 4)

    fn = pl.pallas_call(
        encoder_layer_kernel,
        in_specs=[vmem] * len(inputs),
        out_specs=[vmem, vmem],
        out_shape=[
            jax.ShapeDtypeStruct((B * S, OUT_LANES), jnp.float32),  # lane-dense output
            jax.ShapeDtypeStruct((H, B, S, S), jnp.float32),        # head-major attn
        ],
        cost_estimate=pl.CostEstimate(flops=flops,
                                      transcendentals=transcendentals,
                                      bytes_accessed=bytes_accessed),
    )
    out_wide, attn_hb = fn(*inputs)

    # wrapper-side layout plumbing (tiny XLA ops on a few KiB)
    out = out_wide[:, :D].reshape(B, S, D)
    attn = attn_hb.transpose(1, 0, 2, 3)       # (H,B,S,S) -> (B,H,S,S)
    return out, attn


def reference_encoder_layer(x, mask, params):
    """Pure-JAX reference mirroring the PyTorch module (for the sanity check)."""
    (wq, bq, wk, bk, wv, bv, wo, bo, gamma, beta, w1, b1, w2, b2) = params
    q = x @ wq + bq
    k = x @ wk + bk
    v = x @ wv + bv
    qh = q.reshape(B, S, H, DK).transpose(0, 2, 1, 3)
    kh = k.reshape(B, S, H, DK).transpose(0, 2, 1, 3)
    vh = v.reshape(B, S, H, DK).transpose(0, 2, 1, 3)
    scores = jnp.einsum("bhqd,bhkd->bhqk", qh, kh) / jnp.sqrt(jnp.float32(DK))
    scores = jnp.where(mask[:, None, :, :] > 0.5, -1e9, scores)
    attn = jax.nn.softmax(scores, axis=-1)
    ctx = jnp.einsum("bhqk,bhkd->bhqd", attn, vh)
    ctx = ctx.transpose(0, 2, 1, 3).reshape(B, S, HK)
    out = ctx @ wo + bo
    y = out + x
    mu = jnp.mean(y, axis=-1, keepdims=True)
    var = jnp.mean((y - mu) ** 2, axis=-1, keepdims=True)
    ln = (y - mu) / jnp.sqrt(var + EPS) * gamma + beta
    h1 = jax.nn.gelu(ln @ w1 + b1, approximate=False)
    return h1 @ w2 + b2, attn


def make_params(key):
    ks = jax.random.split(key, 14)
    scale = 0.02

    def lin(k, fan_in, fan_out):
        return scale * jax.random.normal(k, (fan_in, fan_out), jnp.float32)

    def vec(k, n):
        return scale * jax.random.normal(k, (1, n), jnp.float32)

    wq = lin(ks[0], D, HK); bq = vec(ks[6], HK)
    wk = lin(ks[1], D, HK); bk = vec(ks[7], HK)
    wv = lin(ks[2], D, HK); bv = vec(ks[8], HK)
    wo = lin(ks[3], HK, D); bo = vec(ks[9], D)
    gamma = 1.0 + vec(ks[12], D)
    beta = vec(ks[13], D)
    w1 = lin(ks[4], D, DFF); b1 = vec(ks[10], DFF)
    w2 = lin(ks[5], DFF, D); b2 = vec(ks[11], D)
    return (wq, bq, wk, bk, wv, bv, wo, bo, gamma, beta, w1, b1, w2, b2)


if __name__ == "__main__":
    key = jax.random.PRNGKey(0)
    k_x, k_p = jax.random.split(key)

    x = jax.random.normal(k_x, (B, S, D), jnp.float32)
    # padding-style self-attention mask: last 2 key positions masked out
    key_mask = (jnp.arange(S) >= S - 2)
    mask = jnp.broadcast_to(key_mask[None, None, :], (B, S, S)).astype(jnp.float32)

    params = make_params(k_p)

    enc_out, attn = encoder_layer(x, mask, params)
    jax.block_until_ready((enc_out, attn))

    # sanity check against the pure-JAX reference
    ref_out, ref_attn = reference_encoder_layer(x, mask, params)
    assert enc_out.shape == (B, S, D) and attn.shape == (B, H, S, S)
    assert jnp.allclose(enc_out, ref_out, atol=1e-3, rtol=1e-3)
    assert jnp.allclose(attn, ref_attn, atol=1e-3, rtol=1e-3)

    print("KERNEL_OK")
</pallas_src>

<mosaic_0001>
module attributes {stable_mosaic.version = 11 : i64} {
  func.func @encoder_layer_kernel(%arg0: memref<2x8x32xf32, #tpu.memory_space<vmem>>, %arg1: memref<2x8x8xf32, #tpu.memory_space<vmem>>, %arg2: memref<6x32x16xf32, #tpu.memory_space<vmem>>, %arg3: memref<32x32xf32, #tpu.memory_space<vmem>>, %arg4: memref<32x128xf32, #tpu.memory_space<vmem>>, %arg5: memref<128x128xf32, #tpu.memory_space<vmem>>, %arg6: memref<16x128xf32, #tpu.memory_space<vmem>>, %arg7: memref<16x128xf32, #tpu.memory_space<vmem>>, %arg8: memref<2x2x8x8xf32, #tpu.memory_space<vmem>>) attributes {dimension_semantics = [], scalar_prefetch = 0 : i64, scratch_operands = 0 : i64, tpu.core_type = #tpu.core_type<tc>} {
    %c0 = arith.constant 0 : index
    %c0_0 = arith.constant 0 : index
    %c0_1 = arith.constant 0 : index
    %0 = vector.load %arg0[%c0, %c0_0, %c0_1] : memref<2x8x32xf32, #tpu.memory_space<vmem>>, vector<2x8x32xf32>
    %1 = vector.shape_cast %0 : vector<2x8x32xf32> to vector<16x32xf32>
    %c0_2 = arith.constant 0 : index
    %c0_3 = arith.constant 0 : index
    %c0_4 = arith.constant 0 : index
    %2 = vector.load %arg1[%c0_2, %c0_3, %c0_4] : memref<2x8x8xf32, #tpu.memory_space<vmem>>, vector<2x8x8xf32>
    %c0_5 = arith.constant 0 : index
    %c0_6 = arith.constant 0 : index
    %3 = vector.load %arg6[%c0_5, %c0_6] : memref<16x128xf32, #tpu.memory_space<vmem>>, vector<1x16xf32>
    %c2 = arith.constant 2 : index
    %c0_7 = arith.constant 0 : index
    %4 = vector.load %arg6[%c2, %c0_7] : memref<16x128xf32, #tpu.memory_space<vmem>>, vector<1x16xf32>
    %c4 = arith.constant 4 : index
    %c0_8 = arith.constant 0 : index
    %5 = vector.load %arg6[%c4, %c0_8] : memref<16x128xf32, #tpu.memory_space<vmem>>, vector<1x16xf32>
    %c0_9 = arith.constant 0 : index
    %c0_10 = arith.constant 0 : index
    %c0_11 = arith.constant 0 : index
    %6 = vector.load %arg2[%c0_9, %c0_10, %c0_11] : memref<6x32x16xf32, #tpu.memory_space<vmem>>, vector<1x32x16xf32>
    %7 = vector.shape_cast %6 : vector<1x32x16xf32> to vector<32x16xf32>
    %cst = arith.constant dense<0.000000e+00> : vector<16x16xf32>
    %8 = tpu.matmul %1, %7, %cst {dimension_numbers = #tpu.dot_dimension_numbers<[1], [0], [0], [1], [0, 0, 1, 1], [], []>} : vector<16x32xf32>, vector<32x16xf32>, vector<16x16xf32> -> vector<16x16xf32>
    %9 = vector.broadcast %3 : vector<1x16xf32> to vector<16x16xf32>
    %10 = arith.addf %8, %9 : vector<16x16xf32>
    %c2_12 = arith.constant 2 : index
    %c0_13 = arith.constant 0 : index
    %c0_14 = arith.constant 0 : index
    %11 = vector.load %arg2[%c2_12, %c0_13, %c0_14] : memref<6x32x16xf32, #tpu.memory_space<vmem>>, vector<1x32x16xf32>
    %12 = vector.shape_cast %11 : vector<1x32x16xf32> to vector<32x16xf32>
    %cst_15 = arith.constant dense<0.000000e+00> : vector<16x16xf32>
    %13 = tpu.matmul %1, %12, %cst_15 {dimension_numbers = #tpu.dot_dimension_numbers<[1], [0], [0], [1], [0, 0, 1, 1], [], []>} : vector<16x32xf32>, vector<32x16xf32>, vector<16x16xf32> -> vector<16x16xf32>
    %14 = vector.broadcast %4 : vector<1x16xf32> to vector<16x16xf32>
    %15 = arith.addf %13, %14 : vector<16x16xf32>
    %c4_16 = arith.constant 4 : index
    %c0_17 = arith.constant 0 : index
    %c0_18 = arith.constant 0 : index
    %16 = vector.load %arg2[%c4_16, %c0_17, %c0_18] : memref<6x32x16xf32, #tpu.memory_space<vmem>>, vector<1x32x16xf32>
    %17 = vector.shape_cast %16 : vector<1x32x16xf32> to vector<32x16xf32>
    %cst_19 = arith.constant dense<0.000000e+00> : vector<16x16xf32>
    %18 = tpu.matmul %1, %17, %cst_19 {dimension_numbers = #tpu.dot_dimension_numbers<[1], [0], [0], [1], [0, 0, 1, 1], [], []>} : vector<16x32xf32>, vector<32x16xf32>, vector<16x16xf32> -> vector<16x16xf32>
    %19 = vector.broadcast %5 : vector<1x16xf32> to vector<16x16xf32>
    %20 = arith.addf %18, %19 : vector<16x16xf32>
    %21 = vector.shape_cast %10 : vector<16x16xf32> to vector<2x8x16xf32>
    %22 = vector.shape_cast %15 : vector<16x16xf32> to vector<2x8x16xf32>
    %23 = vector.shape_cast %20 : vector<16x16xf32> to vector<2x8x16xf32>
    "tpu.trace_start"() <{level = 10 : i32, message = "bqd,bkd->bqk"}> : () -> ()
    %cst_20 = arith.constant dense<0.000000e+00> : vector<2x8x8xf32>
    %24 = tpu.matmul %21, %22, %cst_20 {dimension_numbers = #tpu.dot_dimension_numbers<[2], [2], [1], [1], [0, 0, 0, 1, 1, 1], [0], [0]>} : vector<2x8x16xf32>, vector<2x8x16xf32>, vector<2x8x8xf32> -> vector<2x8x8xf32>
    "tpu.trace_stop"() : () -> ()
    %25 = arith.addf %24, %2 : vector<2x8x8xf32>
    %cst_21 = arith.constant dense<0xFF800000> : vector<2x8xf32>
    %26 = vector.multi_reduction <maximumf>, %25, %cst_21 [2] : vector<2x8x8xf32> to vector<2x8xf32>
    %27 = vector.shape_cast %26 : vector<2x8xf32> to vector<2x8x1xf32>
    %28 = vector.broadcast %27 : vector<2x8x1xf32> to vector<2x8x8xf32>
    %29 = arith.subf %25, %28 : vector<2x8x8xf32>
    %30 = math.exp %29 : vector<2x8x8xf32>
    %cst_22 = arith.constant dense<0.000000e+00> : vector<2x8xf32>
    %31 = vector.multi_reduction <add>, %30, %cst_22 [2] : vector<2x8x8xf32> to vector<2x8xf32>
    %32 = vector.shape_cast %31 : vector<2x8xf32> to vector<2x8x1xf32>
    %33 = vector.broadcast %32 : vector<2x8x1xf32> to vector<2x8x8xf32>
    %34 = arith.divf %30, %33 : vector<2x8x8xf32>
    %c0_23 = arith.constant 0 : index
    %c0_24 = arith.constant 0 : index
    %c0_25 = arith.constant 0 : index
    %c0_26 = arith.constant 0 : index
    %35 = vector.load %arg8[%c0_23, %c0_24, %c0_25, %c0_26] : memref<2x2x8x8xf32, #tpu.memory_space<vmem>>, vector<1x2x8x8xf32>
    %36 = vector.shape_cast %35 : vector<1x2x8x8xf32> to vector<2x8x8xf32>
    %37 = vector.shape_cast %34 : vector<2x8x8xf32> to vector<1x2x8x8xf32>
    tpu.vector_store %arg8[%c0_23, %c0_24, %c0_25, %c0_26], %37 {strides = array<i32>} : memref<2x2x8x8xf32, #tpu.memory_space<vmem>>, vector<1x2x8x8xf32>,
    "tpu.trace_start"() <{level = 10 : i32, message = "bqk,bkd->bqd"}> : () -> ()
    %cst_27 = arith.constant dense<0.000000e+00> : vector<2x8x16xf32>
    %38 = tpu.matmul %34, %23, %cst_27 {dimension_numbers = #tpu.dot_dimension_numbers<[2], [1], [1], [2], [0, 0, 0, 1, 1, 2], [0], [0]>} : vector<2x8x8xf32>, vector<2x8x16xf32>, vector<2x8x16xf32> -> vector<2x8x16xf32>
    "tpu.trace_stop"() : () -> ()
    %39 = vector.shape_cast %38 : vector<2x8x16xf32> to vector<16x16xf32>
    %c0_28 = arith.constant 0 : index
    %c0_29 = arith.constant 0 : index
    %40 = vector.load %arg3[%c0_28, %c0_29] : memref<32x32xf32, #tpu.memory_space<vmem>>, vector<16x32xf32>
    %cst_30 = arith.constant dense<0.000000e+00> : vector<16x32xf32>
    %41 = tpu.matmul %39, %40, %cst_30 {dimension_numbers = #tpu.dot_dimension_numbers<[1], [0], [0], [1], [0, 0, 1, 1], [], []>} : vector<16x16xf32>, vector<16x32xf32>, vector<16x32xf32> -> vector<16x32xf32>
    %c1 = arith.constant 1 : index
    %c0_31 = arith.constant 0 : index
    %42 = vector.load %arg6[%c1, %c0_31] : memref<16x128xf32, #tpu.memory_space<vmem>>, vector<1x16xf32>
    %c3 = arith.constant 3 : index
    %c0_32 = arith.constant 0 : index
    %43 = vector.load %arg6[%c3, %c0_32] : memref<16x128xf32, #tpu.memory_space<vmem>>, vector<1x16xf32>
    %c5 = arith.constant 5 : index
    %c0_33 = arith.constant 0 : index
    %44 = vector.load %arg6[%c5, %c0_33] : memref<16x128xf32, #tpu.memory_space<vmem>>, vector<1x16xf32>
    %c1_34 = arith.constant 1 : index
    %c0_35 = arith.constant 0 : index
    %c0_36 = arith.constant 0 : index
    %45 = vector.load %arg2[%c1_34, %c0_35, %c0_36] : memref<6x32x16xf32, #tpu.memory_space<vmem>>, vector<1x32x16xf32>
    %46 = vector.shape_cast %45 : vector<1x32x16xf32> to vector<32x16xf32>
    %cst_37 = arith.constant dense<0.000000e+00> : vector<16x16xf32>
    %47 = tpu.matmul %1, %46, %cst_37 {dimension_numbers = #tpu.dot_dimension_numbers<[1], [0], [0], [1], [0, 0, 1, 1], [], []>} : vector<16x32xf32>, vector<32x16xf32>, vector<16x16xf32> -> vector<16x16xf32>
    %48 = vector.broadcast %42 : vector<1x16xf32> to vector<16x16xf32>
    %49 = arith.addf %47, %48 : vector<16x16xf32>
    %c3_38 = arith.constant 3 : index
    %c0_39 = arith.constant 0 : index
    %c0_40 = arith.constant 0 : index
    %50 = vector.load %arg2[%c3_38, %c0_39, %c0_40] : memref<6x32x16xf32, #tpu.memory_space<vmem>>, vector<1x32x16xf32>
    %51 = vector.shape_cast %50 : vector<1x32x16xf32> to vector<32x16xf32>
    %cst_41 = arith.constant dense<0.000000e+00> : vector<16x16xf32>
    %52 = tpu.matmul %1, %51, %cst_41 {dimension_numbers = #tpu.dot_dimension_numbers<[1], [0], [0], [1], [0, 0, 1, 1], [], []>} : vector<16x32xf32>, vector<32x16xf32>, vector<16x16xf32> -> vector<16x16xf32>
    %53 = vector.broadcast %43 : vector<1x16xf32> to vector<16x16xf32>
    %54 = arith.addf %52, %53 : vector<16x16xf32>
    %c5_42 = arith.constant 5 : index
    %c0_43 = arith.constant 0 : index
    %c0_44 = arith.constant 0 : index
    %55 = vector.load %arg2[%c5_42, %c0_43, %c0_44] : memref<6x32x16xf32, #tpu.memory_space<vmem>>, vector<1x32x16xf32>
    %56 = vector.shape_cast %55 : vector<1x32x16xf32> to vector<32x16xf32>
    %cst_45 = arith.constant dense<0.000000e+00> : vector<16x16xf32>
    %57 = tpu.matmul %1, %56, %cst_45 {dimension_numbers = #tpu.dot_dimension_numbers<[1], [0], [0], [1], [0, 0, 1, 1], [], []>} : vector<16x32xf32>, vector<32x16xf32>, vector<16x16xf32> -> vector<16x16xf32>
    %58 = vector.broadcast %44 : vector<1x16xf32> to vector<16x16xf32>
    %59 = arith.addf %57, %58 : vector<16x16xf32>
    %60 = vector.shape_cast %49 : vector<16x16xf32> to vector<2x8x16xf32>
    %61 = vector.shape_cast %54 : vector<16x16xf32> to vector<2x8x16xf32>
    %62 = vector.shape_cast %59 : vector<16x16xf32> to vector<2x8x16xf32>
    "tpu.trace_start"() <{level = 10 : i32, message = "bqd,bkd->bqk"}> : () -> ()
    %cst_46 = arith.constant dense<0.000000e+00> : vector<2x8x8xf32>
    %63 = tpu.matmul %60, %61, %cst_46 {dimension_numbers = #tpu.dot_dimension_numbers<[2], [2], [1], [1], [0, 0, 0, 1, 1, 1], [0], [0]>} : vector<2x8x16xf32>, vector<2x8x16xf32>, vector<2x8x8xf32> -> vector<2x8x8xf32>
    "tpu.trace_stop"() : () -> ()
    %64 = arith.addf %63, %2 : vector<2x8x8xf32>
    %cst_47 = arith.constant dense<0xFF800000> : vector<2x8xf32>
    %65 = vector.multi_reduction <maximumf>, %64, %cst_47 [2] : vector<2x8x8xf32> to vector<2x8xf32>
    %66 = vector.shape_cast %65 : vector<2x8xf32> to vector<2x8x1xf32>
    %67 = vector.broadcast %66 : vector<2x8x1xf32> to vector<2x8x8xf32>
    %68 = arith.subf %64, %67 : vector<2x8x8xf32>
    %69 = math.exp %68 : vector<2x8x8xf32>
    %cst_48 = arith.constant dense<0.000000e+00> : vector<2x8xf32>
    %70 = vector.multi_reduction <add>, %69, %cst_48 [2] : vector<2x8x8xf32> to vector<2x8xf32>
    %71 = vector.shape_cast %70 : vector<2x8xf32> to vector<2x8x1xf32>
    %72 = vector.broadcast %71 : vector<2x8x1xf32> to vector<2x8x8xf32>
    %73 = arith.divf %69, %72 : vector<2x8x8xf32>
    %c1_49 = arith.constant 1 : index
    %c0_50 = arith.constant 0 : index
    %c0_51 = arith.constant 0 : index
    %c0_52 = arith.constant 0 : index
    %74 = vector.load %arg8[%c1_49, %c0_50, %c0_51, %c0_52] : memref<2x2x8x8xf32, #tpu.memory_space<vmem>>, vector<1x2x8x8xf32>
    %75 = vector.shape_cast %74 : vector<1x2x8x8xf32> to vector<2x8x8xf32>
    %76 = vector.shape_cast %73 : vector<2x8x8xf32> to vector<1x2x8x8xf32>
    tpu.vector_store %arg8[%c1_49, %c0_50, %c0_51, %c0_52], %76 {strides = array<i32>} : memref<2x2x8x8xf32, #tpu.memory_space<vmem>>, vector<1x2x8x8xf32>,
    "tpu.trace_start"() <{level = 10 : i32, message = "bqk,bkd->bqd"}> : () -> ()
    %cst_53 = arith.constant dense<0.000000e+00> : vector<2x8x16xf32>
    %77 = tpu.matmul %73, %62, %cst_53 {dimension_numbers = #tpu.dot_dimension_numbers<[2], [1], [1], [2], [0, 0, 0, 1, 1, 2], [0], [0]>} : vector<2x8x8xf32>, vector<2x8x16xf32>, vector<2x8x16xf32> -> vector<2x8x16xf32>
    "tpu.trace_stop"() : () -> ()
    %78 = vector.shape_cast %77 : vector<2x8x16xf32> to vector<16x16xf32>
    %c16 = arith.constant 16 : index
    %c0_54 = arith.constant 0 : index
    %79 = vector.load %arg3[%c16, %c0_54] : memref<32x32xf32, #tpu.memory_space<vmem>>, vector<16x32xf32>
    %cst_55 = arith.constant dense<0.000000e+00> : vector<16x32xf32>
    %80 = tpu.matmul %78, %79, %cst_55 {dimension_numbers = #tpu.dot_dimension_numbers<[1], [0], [0], [1], [0, 0, 1, 1], [], []>} : vector<16x16xf32>, vector<16x32xf32>, vector<16x32xf32> -> vector<16x32xf32>
    %81 = arith.addf %41, %80 : vector<16x32xf32>
    %c6 = arith.constant 6 : index
    %c0_56 = arith.constant 0 : index
    %82 = vector.load %arg6[%c6, %c0_56] : memref<16x128xf32, #tpu.memory_space<vmem>>, vector<1x32xf32>
    %c7 = arith.constant 7 : index
    %c0_57 = arith.constant 0 : index
    %83 = vector.load %arg6[%c7, %c0_57] : memref<16x128xf32, #tpu.memory_space<vmem>>, vector<1x32xf32>
    %c8 = arith.constant 8 : index
    %c0_58 = arith.constant 0 : index
    %84 = vector.load %arg6[%c8, %c0_58] : memref<16x128xf32, #tpu.memory_space<vmem>>, vector<1x32xf32>
    %85 = vector.broadcast %82 : vector<1x32xf32> to vector<16x32xf32>
    %86 = arith.addf %81, %85 : vector<16x32xf32>
    %87 = arith.addf %86, %1 : vector<16x32xf32>
    %cst_59 = arith.constant dense<0.000000e+00> : vector<16xf32>
    %88 = vector.multi_reduction <add>, %87, %cst_59 [1] : vector<16x32xf32> to vector<16xf32>
    %89 = vector.shape_cast %88 : vector<16xf32> to vector<16x1xf32>
    %cst_60 = arith.constant 3.200000e+01 : f32
    %90 = vector.broadcast %cst_60 : f32 to vector<16x1xf32>
    %91 = arith.divf %89, %90 : vector<16x1xf32>
    %92 = vector.broadcast %91 : vector<16x1xf32> to vector<16x32xf32>
    %93 = arith.subf %87, %92 : vector<16x32xf32>
    %94 = arith.mulf %93, %93 : vector<16x32xf32>
    %cst_61 = arith.constant dense<0.000000e+00> : vector<16xf32>
    %95 = vector.multi_reduction <add>, %94, %cst_61 [1] : vector<16x32xf32> to vector<16xf32>
    %96 = vector.shape_cast %95 : vector<16xf32> to vector<16x1xf32>
    %cst_62 = arith.constant 3.200000e+01 : f32
    %97 = vector.broadcast %cst_62 : f32 to vector<16x1xf32>
    %98 = arith.divf %96, %97 : vector<16x1xf32>
    %99 = vector.broadcast %91 : vector<16x1xf32> to vector<16x32xf32>
    %100 = arith.subf %87, %99 : vector<16x32xf32>
    %cst_63 = arith.constant 9.99999974E-6 : f32
    %101 = vector.broadcast %cst_63 : f32 to vector<16x1xf32>
    %102 = arith.addf %98, %101 : vector<16x1xf32>
    %103 = math.rsqrt %102 : vector<16x1xf32>
    %104 = vector.broadcast %103 : vector<16x1xf32> to vector<16x32xf32>
    %105 = arith.mulf %100, %104 : vector<16x32xf32>
    %106 = vector.broadcast %83 : vector<1x32xf32> to vector<16x32xf32>
    %107 = arith.mulf %105, %106 : vector<16x32xf32>
    %108 = vector.broadcast %84 : vector<1x32xf32> to vector<16x32xf32>
    %109 = arith.addf %107, %108 : vector<16x32xf32>
    %c9 = arith.constant 9 : index
    %c0_64 = arith.constant 0 : index
    %110 = vector.load %arg6[%c9, %c0_64] : memref<16x128xf32, #tpu.memory_space<vmem>>, vector<1x128xf32>
    %c10 = arith.constant 10 : index
    %c0_65 = arith.constant 0 : index
    %111 = vector.load %arg6[%c10, %c0_65] : memref<16x128xf32, #tpu.memory_space<vmem>>, vector<1x128xf32>
    %c0_66 = arith.constant 0 : index
    %c0_67 = arith.constant 0 : index
    %112 = vector.load %arg4[%c0_66, %c0_67] : memref<32x128xf32, #tpu.memory_space<vmem>>, vector<32x128xf32>
    %cst_68 = arith.constant dense<0.000000e+00> : vector<16x128xf32>
    %113 = tpu.matmul %109, %112, %cst_68 {dimension_numbers = #tpu.dot_dimension_numbers<[1], [0], [0], [1], [0, 0, 1, 1], [], []>} : vector<16x32xf32>, vector<32x128xf32>, vector<16x128xf32> -> vector<16x128xf32>
    %114 = vector.broadcast %110 : vector<1x128xf32> to vector<16x128xf32>
    %115 = arith.addf %113, %114 : vector<16x128xf32>
    %cst_69 = arith.constant 5.000000e-01 : f32
    %116 = vector.broadcast %cst_69 : f32 to vector<16x128xf32>
    %117 = arith.mulf %116, %115 : vector<16x128xf32>
    %cst_70 = arith.constant 0.707106769 : f32
    %118 = vector.broadcast %cst_70 : f32 to vector<16x128xf32>
    %119 = arith.mulf %115, %118 : vector<16x128xf32>
    %120 = math.absf %119 : vector<16x128xf32>
    %cst_71 = arith.constant 0.327591091 : f32
    %121 = vector.broadcast %cst_71 : f32 to vector<16x128xf32>
    %122 = arith.mulf %121, %120 : vector<16x128xf32>
    %cst_72 = arith.constant 1.000000e+00 : f32
    %123 = vector.broadcast %cst_72 : f32 to vector<16x128xf32>
    %124 = arith.addf %123, %122 : vector<16x128xf32>
    %cst_73 = arith.constant 1.000000e+00 : f32
    %125 = vector.broadcast %cst_73 : f32 to vector<16x128xf32>
    %126 = arith.divf %125, %124 : vector<16x128xf32>
    %cst_74 = arith.constant 1.06140542 : f32
    %127 = vector.broadcast %cst_74 : f32 to vector<16x128xf32>
    %128 = arith.mulf %127, %126 : vector<16x128xf32>
    %cst_75 = arith.constant -1.45315206 : f32
    %129 = vector.broadcast %cst_75 : f32 to vector<16x128xf32>
    %130 = arith.addf %128, %129 : vector<16x128xf32>
    %131 = arith.mulf %130, %126 : vector<16x128xf32>
    %cst_76 = arith.constant 1.42141378 : f32
    %132 = vector.broadcast %cst_76 : f32 to vector<16x128xf32>
    %133 = arith.addf %131, %132 : vector<16x128xf32>
    %134 = arith.mulf %133, %126 : vector<16x128xf32>
    %cst_77 = arith.constant -0.284496725 : f32
    %135 = vector.broadcast %cst_77 : f32 to vector<16x128xf32>
    %136 = arith.addf %134, %135 : vector<16x128xf32>
    %137 = arith.mulf %136, %126 : vector<16x128xf32>
    %cst_78 = arith.constant 0.254829586 : f32
    %138 = vector.broadcast %cst_78 : f32 to vector<16x128xf32>
    %139 = arith.addf %137, %138 : vector<16x128xf32>
    %140 = arith.mulf %139, %126 : vector<16x128xf32>
    %cst_79 = arith.constant 0.000000e+00 : f32
    %141 = vector.broadcast %cst_79 : f32 to vector<16x128xf32>
    %142 = arith.subf %141, %120 : vector<16x128xf32>
    %143 = arith.mulf %142, %120 : vector<16x128xf32>
    %144 = math.exp %143 : vector<16x128xf32>
    %145 = arith.mulf %140, %144 : vector<16x128xf32>
    %cst_80 = arith.constant 1.000000e+00 : f32
    %146 = vector.broadcast %cst_80 : f32 to vector<16x128xf32>
    %147 = arith.subf %146, %145 : vector<16x128xf32>
    %cst_81 = arith.constant 0.000000e+00 : f32
    %148 = vector.broadcast %cst_81 : f32 to vector<16x128xf32>
    %149 = arith.cmpf oge, %119, %148 : vector<16x128xf32>
    %cst_82 = arith.constant 0.000000e+00 : f32
    %150 = vector.broadcast %cst_82 : f32 to vector<16x128xf32>
    %151 = arith.subf %150, %147 : vector<16x128xf32>
    %152 = arith.select %149, %147, %151 : vector<16x128xi1>, vector<16x128xf32>
    %cst_83 = arith.constant 1.000000e+00 : f32
    %153 = vector.broadcast %cst_83 : f32 to vector<16x128xf32>
    %154 = arith.addf %153, %152 : vector<16x128xf32>
    %155 = arith.mulf %117, %154 : vector<16x128xf32>
    %c0_84 = arith.constant 0 : index
    %c0_85 = arith.constant 0 : index
    %156 = vector.load %arg5[%c0_84, %c0_85] : memref<128x128xf32, #tpu.memory_space<vmem>>, vector<128x128xf32>
    %cst_86 = arith.constant dense<0.000000e+00> : vector<16x128xf32>
    %157 = tpu.matmul %155, %156, %cst_86 {dimension_numbers = #tpu.dot_dimension_numbers<[1], [0], [0], [1], [0, 0, 1, 1], [], []>} : vector<16x128xf32>, vector<128x128xf32>, vector<16x128xf32> -> vector<16x128xf32>
    %158 = vector.broadcast %111 : vector<1x128xf32> to vector<16x128xf32>
    %159 = arith.addf %157, %158 : vector<16x128xf32>
    %c0_87 = arith.constant 0 : index
    %c0_88 = arith.constant 0 : index
    %160 = vector.load %arg7[%c0_87, %c0_88] : memref<16x128xf32, #tpu.memory_space<vmem>>, vector<16x128xf32>
    tpu.vector_store %arg7[%c0_87, %c0_88], %159 {strides = array<i32>} : memref<16x128xf32, #tpu.memory_space<vmem>>, vector<16x128xf32>,
    return
  }
}

</mosaic_0001>

<llo_original>
// kernel: tpu_custom_call.1
$region0: #{tpu_custom_call.1}
  #allocation0 [shape = 'u32[]', space=smem, size = 0x4, offset = 0x4, fixed_abs, tag = 'smem constant byte address 0x4 - core index']
  #allocation1 [shape = 'u32[144,128]{1,0:T(1,128)}', space=vmem, size = 0x12000, scoped, tag = 'internal scratch']
  %s0 = inlined_call_operand.vmem [shape: f32[2,8,32], index: 0, kind: input, shape index: {}]
  %s1 = inlined_call_operand.vmem [shape: f32[2,8,8], index: 1, kind: input, shape index: {}]
  %s2 = inlined_call_operand.vmem [shape: f32[6,32,16], index: 2, kind: input, shape index: {}]
  %s3 = inlined_call_operand.vmem [shape: f32[32,32], index: 3, kind: input, shape index: {}]
  %s4 = inlined_call_operand.vmem [shape: f32[32,128], index: 4, kind: input, shape index: {}]
  %s5 = inlined_call_operand.vmem [shape: f32[128,128], index: 5, kind: input, shape index: {}]
  %s6 = inlined_call_operand.vmem [shape: f32[16,128], index: 6, kind: input, shape index: {}]
  %s7 = inlined_call_operand.hbm [shape: f32[16,128], index: 7, kind: output, shape index: {0}]
  %s8 = inlined_call_operand.hbm [shape: f32[2,2,8,8], index: 8, kind: output, shape index: {1}]
  %9 = xla_tuple %s7, %s8
  %s10 = sld [smem:[#allocation0]]
  $region46: #{tpu_custom_call.1} parent=0
    _
  %s12 = ssub.s32 1, %s10
  %s13 = scalar_select 0, %s12, %s10
  $region1: #{tpu_custom_call.1} parent=0
    #allocation2 [shape = 'u8[8192]{0}', space=vmem, size = 0x2000, scoped, tag = 'output window, operand 0, single buffered']
    #allocation3 [shape = 's32[1]{0}', space=sflag, size = 0x4, scoped, tag = 'scoped memory for tpu_custom_call.1']
    #allocation4 [shape = 'u8[16384]{0}', space=vmem, size = 0x4000, scoped, tag = 'output window, operand 1, single buffered']
    #allocation5 [shape = 's32[1]{0}', space=sflag, size = 0x4, scoped, tag = 'scoped memory for tpu_custom_call.1']
    %14 = vsyncpa [#allocation3], 0
    %15 = vsyncpa [#allocation5], 0
    // Predicated region
    $region2: #{tpu_custom_call.1} parent=1 // pred_check
      _
    $region3: #{tpu_custom_call.1} parent=1 // pred_check_branch
      %17 = sbr.rel (0) target = $region5
    $region4: #{tpu_custom_call.1} parent=1 // pred_region
      _
    $region5: #{tpu_custom_call.1} parent=1 // pred_fallthru
      _
    // Predicated region
    $region6: #{tpu_custom_call.1} parent=1 // pred_check
      _
    $region7: #{tpu_custom_call.1} parent=1 // pred_check_branch
      %19 = sbr.rel (0) target = $region9
    $region8: #{tpu_custom_call.1} parent=1 // pred_region
      _
    $region9: #{tpu_custom_call.1} parent=1 // pred_fallthru
      _
    // Predicated region
    $region10: #{tpu_custom_call.1} parent=1 // pred_check
      _
    $region11: #{tpu_custom_call.1} parent=1 // pred_check_branch
      %21 = sbr.rel (0) target = $region13
    $region12: #{tpu_custom_call.1} parent=1 // pred_region
      _
    $region13: #{tpu_custom_call.1} parent=1 // pred_fallthru
      _
    // Predicated region
    $region14: #{tpu_custom_call.1} parent=1 // pred_check
      _
    $region15: #{tpu_custom_call.1} parent=1 // pred_check_branch
      %23 = sbr.rel (0) target = $region17
    $region16: #{tpu_custom_call.1} parent=1 // pred_region
      _
    $region17: #{tpu_custom_call.1} parent=1 // pred_fallthru
      _
    // Predicated region
    $region18: #{tpu_custom_call.1} parent=1 // pred_check
      _
    $region19: #{tpu_custom_call.1} parent=1 // pred_check_branch
      %25 = sbr.rel (0) target = $region21
    $region20: #{tpu_custom_call.1} parent=1 // pred_region
      _
    $region21: #{tpu_custom_call.1} parent=1 // pred_fallthru
      _
    // Predicated region
    $region22: #{tpu_custom_call.1} parent=1 // pred_check
      _
    $region23: #{tpu_custom_call.1} parent=1 // pred_check_branch
      %27 = sbr.rel (0) target = $region25
    $region24: #{tpu_custom_call.1} parent=1 // pred_region
      _
    $region25: #{tpu_custom_call.1} parent=1 // pred_fallthru
      _
    // Predicated region
    $region26: #{tpu_custom_call.1} parent=1 // pred_check
      _
    $region27: #{tpu_custom_call.1} parent=1 // pred_check_branch
      %29 = sbr.rel (0) target = $region29
    $region28: #{tpu_custom_call.1} parent=1 // pred_region
      _
    $region29: #{tpu_custom_call.1} parent=1 // pred_fallthru
      _
    %v30 = vld [vmem:[%s0] sm:$0xff]
    %v31 = vld [vmem:[%s0 + $0x8] sm:$0xff]
    %v32 = vld [vmem:[%s1] sm:$0xff]
    %v33 = vld [vmem:[%s1 + $0x8] sm:$0xff]
    %v34 = vld [vmem:[%s6] sm:$0x1]
    %v35 = vld [vmem:[%s6 + $0x2] sm:$0x1]
    %v36 = vld [vmem:[%s6 + $0x4] sm:$0x1]
    %v37 = vld [vmem:[%s2] sm:$0xff]
    %v38 = vld [vmem:[%s2 + $0x8] sm:$0xff]
    %v39 = vld [vmem:[%s2 + $0x10] sm:$0xff]
    %v40 = vld [vmem:[%s2 + $0x18] sm:$0xff]
    %v41 = vlaneseq
    %v42 = vshrl.u32 %v41, 7
    %v43 = vsub.s32 0, %v42
    %v44 = vrot.slane %v34, %v43
    %vm45 = vcmask 261120
    %v47 = vsel %vm45, %v30, 0
    %v50 = vsel %vm45, %v31, 0
    %52 = vmatprep.subr.mxu0 0.0
    %53 = vmatpush1.msra.mxu0 %v37
    %54 = vmatprep.subr.mxu0 0.0
    %55 = vmatpush1.msra.mxu0 %v38
    %56 = vmatprep.subr.mxu0 0.0
    %57 = vmatpush1.msra.mxu0 %v39
    %58 = vmatprep.subr.mxu0 0.0
    %59 = vmatpush1.msra.mxu0 %v40
    %60 = vmatprep.subr.mxu0 0.0
    %61 = vmatpush1.msra.mxu0 0.0
    %62 = vmatprep.subr.mxu0 0.0
    %63 = vmatpush1.msra.mxu0 0.0
    %64 = vmatprep.subr.mxu0 0.0
    %65 = vmatpush1.msra.mxu0 0.0
    %66 = vmatprep.subr.mxu0 0.0
    %67 = vmatpush1.msra.mxu0 0.0
    %68 = vmatprep.subr.mxu0 0.0
    %69 = vmatpush1.msra.mxu0 0.0
    %70 = vmatprep.subr.mxu0 0.0
    %71 = vmatpush1.msra.mxu0 0.0
    %72 = vmatprep.subr.mxu0 0.0
    %73 = vmatpush1.msra.mxu0 0.0
    %74 = vmatprep.subr.mxu0 0.0
    %75 = vmatpush1.msra.mxu0 0.0
    %76 = vmatprep.subr.mxu0 0.0
    %77 = vmatpush1.msra.mxu0 0.0
    %78 = vmatprep.subr.mxu0 0.0
    %79 = vmatpush1.msra.mxu0 0.0
    %80 = vmatprep.subr.mxu0 0.0
    %81 = vmatpush1.msra.mxu0 0.0
    %82 = vmatprep.subr.mxu0 0.0
    %83 = vmatpush1.msra.mxu0 0.0
    %84 = vmatprep.subr.mxu0 0.0
    %85 = vmatpush1.msra.mxu0 0.0
    %86 = vmatprep.subr.mxu0 0.0
    %87 = vmatpush1.msra.mxu0 0.0
    %88 = vmatprep.subr.mxu0 0.0
    %89 = vmatpush1.msra.mxu0 0.0
    %90 = vmatprep.subr.mxu0 0.0
    %91 = vmatpush1.msra.mxu0 0.0
    %92 = vmatprep.subr.mxu0 0.0
    %93 = vmatpush1.msra.mxu0 0.0
    %94 = vmatprep.subr.mxu0 0.0
    %95 = vmatpush1.msra.mxu0 0.0
    %96 = vmatprep.subr.mxu0 0.0
    %97 = vmatpush1.msra.mxu0 0.0
    %98 = vmatprep.subr.mxu0 0.0
    %99 = vmatpush1.msra.mxu0 0.0
    %100 = vmatprep.subr.mxu0 0.0
    %101 = vmatpush1.msra.mxu0 0.0
    %102 = vmatprep.subr.mxu0 0.0
    %103 = vmatpush1.msra.mxu0 0.0
    %104 = vmatprep.subr.mxu0 0.0
    %105 = vmatpush1.msra.mxu0 0.0
    %106 = vmatprep.subr.mxu0 0.0
    %107 = vmatpush1.msra.mxu0 0.0
    %108 = vmatprep.subr.mxu0 0.0
    %109 = vmatpush1.msra.mxu0 0.0
    %110 = vmatprep.subr.mxu0 0.0
    %111 = vmatpush1.msra.mxu0 0.0
    %112 = vmatprep.subr.mxu0 0.0
    %113 = vmatpush1.msra.mxu0 0.0
    %114 = vmatprep.subr.mxu0 0.0
    %115 = vmatpush1.msra.mxu0 0.0
    %116 = vmatprep.mubr.f32.mxu0 0.0
    %117 = vmatmul.mubr.f32.gmra.mrb[0].mxu0 %v47
    %v118 = vpop.f32.mrb[0].mxu0
    %v119 = vadd.f32 %v44, %v118
    %v120 = vpop.f32.mrb[0].mxu0
    %121 = vmatprep.mubr.f32.mxu0 0.0
    %122 = vmatmul.mubr.f32.gmra.mrb[0].mxu0 %v50
    %v123 = vpop.f32.mrb[0].mxu0
    %v124 = vadd.f32 %v44, %v123
    %v125 = vpop.f32.mrb[0].mxu0
    %126 = vdwg.mxu0
    %s127 = scalar_lea.vmem %s2, 64
    %v128 = vld [vmem:[%s127] sm:$0xff]
    %v129 = vld [vmem:[%s127 + $0x8] sm:$0xff]
    %v130 = vld [vmem:[%s127 + $0x10] sm:$0xff]
    %v131 = vld [vmem:[%s127 + $0x18] sm:$0xff]
    %v132 = vlaneseq
    %v133 = vshrl.u32 %v132, 7
    %v134 = vsub.s32 0, %v133
    %v135 = vrot.slane %v35, %v134
    %136 = vmatprep.subr.mxu0 0.0
    %137 = vmatpush1.msra.mxu0 %v128
    %138 = vmatprep.subr.mxu0 0.0
    %139 = vmatpush1.msra.mxu0 %v129
    %140 = vmatprep.subr.mxu0 0.0
    %141 = vmatpush1.msra.mxu0 %v130
    %142 = vmatprep.subr.mxu0 0.0
    %143 = vmatpush1.msra.mxu0 %v131
    %144 = vmatprep.subr.mxu0 0.0
    %145 = vmatpush1.msra.mxu0 0.0
    %146 = vmatprep.subr.mxu0 0.0
    %147 = vmatpush1.msra.mxu0 0.0
    %148 = vmatprep.subr.mxu0 0.0
    %149 = vmatpush1.msra.mxu0 0.0
    %150 = vmatprep.subr.mxu0 0.0
    %151 = vmatpush1.msra.mxu0 0.0
    %152 = vmatprep.subr.mxu0 0.0
    %153 = vmatpush1.msra.mxu0 0.0
    %154 = vmatprep.subr.mxu0 0.0
    %155 = vmatpush1.msra.mxu0 0.0
    %156 = vmatprep.subr.mxu0 0.0
    %157 = vmatpush1.msra.mxu0 0.0
    %158 = vmatprep.subr.mxu0 0.0
    %159 = vmatpush1.msra.mxu0 0.0
    %160 = vmatprep.subr.mxu0 0.0
    %161 = vmatpush1.msra.mxu0 0.0
    %162 = vmatprep.subr.mxu0 0.0
    %163 = vmatpush1.msra.mxu0 0.0
    %164 = vmatprep.subr.mxu0 0.0
    %165 = vmatpush1.msra.mxu0 0.0
    %166 = vmatprep.subr.mxu0 0.0
    %167 = vmatpush1.msra.mxu0 0.0
    %168 = vmatprep.subr.mxu0 0.0
    %169 = vmatpush1.msra.mxu0 0.0
    %170 = vmatprep.subr.mxu0 0.0
    %171 = vmatpush1.msra.mxu0 0.0
    %172 = vmatprep.subr.mxu0 0.0
    %173 = vmatpush1.msra.mxu0 0.0
    %174 = vmatprep.subr.mxu0 0.0
    %175 = vmatpush1.msra.mxu0 0.0
    %176 = vmatprep.subr.mxu0 0.0
    %177 = vmatpush1.msra.mxu0 0.0
    %178 = vmatprep.subr.mxu0 0.0
    %179 = vmatpush1.msra.mxu0 0.0
    %180 = vmatprep.subr.mxu0 0.0
    %181 = vmatpush1.msra.mxu0 0.0
    %182 = vmatprep.subr.mxu0 0.0
    %183 = vmatpush1.msra.mxu0 0.0
    %184 = vmatprep.subr.mxu0 0.0
    %185 = vmatpush1.msra.mxu0 0.0
    %186 = vmatprep.subr.mxu0 0.0
    %187 = vmatpush1.msra.mxu0 0.0
    %188 = vmatprep.subr.mxu0 0.0
    %189 = vmatpush1.msra.mxu0 0.0
    %190 = vmatprep.subr.mxu0 0.0
    %191 = vmatpush1.msra.mxu0 0.0
    %192 = vmatprep.subr.mxu0 0.0
    %193 = vmatpush1.msra.mxu0 0.0
    %194 = vmatprep.subr.mxu0 0.0
    %195 = vmatpush1.msra.mxu0 0.0
    %196 = vmatprep.subr.mxu0 0.0
    %197 = vmatpush1.msra.mxu0 0.0
    %198 = vmatprep.subr.mxu0 0.0
    %199 = vmatpush1.msra.mxu0 0.0
    %200 = vmatprep.mubr.f32.mxu0 0.0
    %201 = vmatmul.mubr.f32.gmra.mrb[0].mxu0 %v47
    %v202 = vpop.f32.mrb[0].mxu0
    %v203 = vadd.f32 %v135, %v202
    %v204 = vpop.f32.mrb[0].mxu0
    %205 = vmatprep.mubr.f32.mxu0 0.0
    %206 = vmatmul.mubr.f32.gmra.mrb[0].mxu0 %v50
    %v207 = vpop.f32.mrb[0].mxu0
    %v208 = vadd.f32 %v135, %v207
    %v209 = vpop.f32.mrb[0].mxu0
    %210 = vdwg.mxu0
    %s211 = scalar_lea.vmem %s2, 128
    %v212 = vld [vmem:[%s211] sm:$0xff]
    %v213 = vld [vmem:[%s211 + $0x8] sm:$0xff]
    %v214 = vld [vmem:[%s211 + $0x10] sm:$0xff]
    %v215 = vld [vmem:[%s211 + $0x18] sm:$0xff]
    %v216 = vlaneseq
    %v217 = vshrl.u32 %v216, 7
    %v218 = vsub.s32 0, %v217
    %v219 = vrot.slane %v36, %v218
    %220 = vmatprep.subr.mxu0 0.0
    %221 = vmatpush1.msra.mxu0 %v212
    %222 = vmatprep.subr.mxu0 0.0
    %223 = vmatpush1.msra.mxu0 %v213
    %224 = vmatprep.subr.mxu0 0.0
    %225 = vmatpush1.msra.mxu0 %v214
    %226 = vmatprep.subr.mxu0 0.0
    %227 = vmatpush1.msra.mxu0 %v215
    %228 = vmatprep.subr.mxu0 0.0
    %229 = vmatpush1.msra.mxu0 0.0
    %230 = vmatprep.subr.mxu0 0.0
    %231 = vmatpush1.msra.mxu0 0.0
    %232 = vmatprep.subr.mxu0 0.0
    %233 = vmatpush1.msra.mxu0 0.0
    %234 = vmatprep.subr.mxu0 0.0
    %235 = vmatpush1.msra.mxu0 0.0
    %236 = vmatprep.subr.mxu0 0.0
    %237 = vmatpush1.msra.mxu0 0.0
    %238 = vmatprep.subr.mxu0 0.0
    %239 = vmatpush1.msra.mxu0 0.0
    %240 = vmatprep.subr.mxu0 0.0
    %241 = vmatpush1.msra.mxu0 0.0
    %242 = vmatprep.subr.mxu0 0.0
    %243 = vmatpush1.msra.mxu0 0.0
    %244 = vmatprep.subr.mxu0 0.0
    %245 = vmatpush1.msra.mxu0 0.0
    %246 = vmatprep.subr.mxu0 0.0
    %247 = vmatpush1.msra.mxu0 0.0
    %248 = vmatprep.subr.mxu0 0.0
    %249 = vmatpush1.msra.mxu0 0.0
    %250 = vmatprep.subr.mxu0 0.0
    %251 = vmatpush1.msra.mxu0 0.0
    %252 = vmatprep.subr.mxu0 0.0
    %253 = vmatpush1.msra.mxu0 0.0
    %254 = vmatprep.subr.mxu0 0.0
    %255 = vmatpush1.msra.mxu0 0.0
    %256 = vmatprep.subr.mxu0 0.0
    %257 = vmatpush1.msra.mxu0 0.0
    %258 = vmatprep.subr.mxu0 0.0
    %259 = vmatpush1.msra.mxu0 0.0
    %260 = vmatprep.subr.mxu0 0.0
    %261 = vmatpush1.msra.mxu0 0.0
    %262 = vmatprep.subr.mxu0 0.0
    %263 = vmatpush1.msra.mxu0 0.0
    %264 = vmatprep.subr.mxu0 0.0
    %265 = vmatpush1.msra.mxu0 0.0
    %266 = vmatprep.subr.mxu0 0.0
    %267 = vmatpush1.msra.mxu0 0.0
    %268 = vmatprep.subr.mxu0 0.0
    %269 = vmatpush1.msra.mxu0 0.0
    %270 = vmatprep.subr.mxu0 0.0
    %271 = vmatpush1.msra.mxu0 0.0
    %272 = vmatprep.subr.mxu0 0.0
    %273 = vmatpush1.msra.mxu0 0.0
    %274 = vmatprep.subr.mxu0 0.0
    %275 = vmatpush1.msra.mxu0 0.0
    %276 = vmatprep.subr.mxu0 0.0
    %277 = vmatpush1.msra.mxu0 0.0
    %278 = vmatprep.subr.mxu0 0.0
    %279 = vmatpush1.msra.mxu0 0.0
    %280 = vmatprep.subr.mxu0 0.0
    %281 = vmatpush1.msra.mxu0 0.0
    %282 = vmatprep.subr.mxu0 0.0
    %283 = vmatpush1.msra.mxu0 0.0
    %284 = vmatprep.mubr.f32.mxu0 0.0
    %285 = vmatmul.mubr.f32.gmra.mrb[0].mxu0 %v47
    %v286 = vpop.f32.mrb[0].mxu0
    %v287 = vadd.f32 %v219, %v286
    %v288 = vpop.f32.mrb[0].mxu0
    %289 = vmatprep.mubr.f32.mxu0 0.0
    %290 = vmatmul.mubr.f32.gmra.mrb[0].mxu0 %v50
    %v291 = vpop.f32.mrb[0].mxu0
    %v292 = vadd.f32 %v219, %v291
    %v293 = vpop.f32.mrb[0].mxu0
    %294 = vdwg.mxu0
    %vm295 = vcmask 130048
    %v297 = vsel %vm295, %v119, 0
    %v300 = vsel %vm295, %v203, 0
    %302 = vmatprep.subr.mxu0 0.0
    %303 = vmatpush1.xpose.msra.mxu0 %v300
    %304 = vmatprep.subr.mxu0 0.0
    %305 = vmatpush1.xpose.msra.mxu0 0.0
    %306 = vmatprep.subr.mxu0 0.0
    %307 = vmatpush1.xpose.msra.mxu0 0.0
    %308 = vmatprep.subr.mxu0 0.0
    %309 = vmatpush1.xpose.msra.mxu0 0.0
    %310 = vmatprep.subr.mxu0 0.0
    %311 = vmatpush1.xpose.msra.mxu0 0.0
    %312 = vmatprep.subr.mxu0 0.0
    %313 = vmatpush1.xpose.msra.mxu0 0.0
    %314 = vmatprep.subr.mxu0 0.0
    %315 = vmatpush1.xpose.msra.mxu0 0.0
    %316 = vmatprep.subr.mxu0 0.0
    %317 = vmatpush1.xpose.msra.mxu0 0.0
    %318 = vmatprep.subr.mxu0 0.0
    %319 = vmatpush1.xpose.msra.mxu0 0.0
    %320 = vmatprep.subr.mxu0 0.0
    %321 = vmatpush1.xpose.msra.mxu0 0.0
    %322 = vmatprep.subr.mxu0 0.0
    %323 = vmatpush1.xpose.msra.mxu0 0.0
    %324 = vmatprep.subr.mxu0 0.0
    %325 = vmatpush1.xpose.msra.mxu0 0.0
    %326 = vmatprep.subr.mxu0 0.0
    %327 = vmatpush1.xpose.msra.mxu0 0.0
    %328 = vmatprep.subr.mxu0 0.0
    %329 = vmatpush1.xpose.msra.mxu0 0.0
    %330 = vmatprep.subr.mxu0 0.0
    %331 = vmatpush1.xpose.msra.mxu0 0.0
    %332 = vmatprep.subr.mxu0 0.0
    %333 = vmatpush1.xpose.msra.mxu0 0.0
    %334 = vmatprep.subr.mxu0 0.0
    %335 = vmatpush1.xpose.msra.mxu0 0.0
    %336 = vmatprep.subr.mxu0 0.0
    %337 = vmatpush1.xpose.msra.mxu0 0.0
    %338 = vmatprep.subr.mxu0 0.0
    %339 = vmatpush1.xpose.msra.mxu0 0.0
    %340 = vmatprep.subr.mxu0 0.0
    %341 = vmatpush1.xpose.msra.mxu0 0.0
    %342 = vmatprep.subr.mxu0 0.0
    %343 = vmatpush1.xpose.msra.mxu0 0.0
    %344 = vmatprep.subr.mxu0 0.0
    %345 = vmatpush1.xpose.msra.mxu0 0.0
    %346 = vmatprep.subr.mxu0 0.0
    %347 = vmatpush1.xpose.msra.mxu0 0.0
    %348 = vmatprep.subr.mxu0 0.0
    %349 = vmatpush1.xpose.msra.mxu0 0.0
    %350 = vmatprep.subr.mxu0 0.0
    %351 = vmatpush1.xpose.msra.mxu0 0.0
    %352 = vmatprep.subr.mxu0 0.0
    %353 = vmatpush1.xpose.msra.mxu0 0.0
    %354 = vmatprep.subr.mxu0 0.0
    %355 = vmatpush1.xpose.msra.mxu0 0.0
    %356 = vmatprep.subr.mxu0 0.0
    %357 = vmatpush1.xpose.msra.mxu0 0.0
    %358 = vmatprep.subr.mxu0 0.0
    %359 = vmatpush1.xpose.msra.mxu0 0.0
    %360 = vmatprep.subr.mxu0 0.0
    %361 = vmatpush1.xpose.msra.mxu0 0.0
    %362 = vmatprep.subr.mxu0 0.0
    %363 = vmatpush1.xpose.msra.mxu0 0.0
    %364 = vmatprep.subr.mxu0 0.0
    %365 = vmatpush1.xpose.msra.mxu0 0.0
    %366 = vmatprep.mubr.f32.mxu0 0.0
    %367 = vmatmul.mubr.f32.gmra.mrb[0].mxu0 %v297
    %v368 = vpop.f32.mrb[0].mxu0
    %v369 = vadd.f32 %v32, %v368
    %v370 = vpop.f32.mrb[0].mxu0
    %371 = vdwg.mxu0
    %v373 = vsel %vm295, %v124, 0
    %v376 = vsel %vm295, %v208, 0
    %378 = vmatprep.subr.mxu0 0.0
    %379 = vmatpush1.xpose.msra.mxu0 %v376
    %380 = vmatprep.subr.mxu0 0.0
    %381 = vmatpush1.xpose.msra.mxu0 0.0
    %382 = vmatprep.subr.mxu0 0.0
    %383 = vmatpush1.xpose.msra.mxu0 0.0
    %384 = vmatprep.subr.mxu0 0.0
    %385 = vmatpush1.xpose.msra.mxu0 0.0
    %386 = vmatprep.subr.mxu0 0.0
    %387 = vmatpush1.xpose.msra.mxu0 0.0
    %388 = vmatprep.subr.mxu0 0.0
    %389 = vmatpush1.xpose.msra.mxu0 0.0
    %390 = vmatprep.subr.mxu0 0.0
    %391 = vmatpush1.xpose.msra.mxu0 0.0
    %392 = vmatprep.subr.mxu0 0.0
    %393 = vmatpush1.xpose.msra.mxu0 0.0
    %394 = vmatprep.subr.mxu0 0.0
    %395 = vmatpush1.xpose.msra.mxu0 0.0
    %396 = vmatprep.subr.mxu0 0.0
    %397 = vmatpush1.xpose.msra.mxu0 0.0
    %398 = vmatprep.subr.mxu0 0.0
    %399 = vmatpush1.xpose.msra.mxu0 0.0
    %400 = vmatprep.subr.mxu0 0.0
    %401 = vmatpush1.xpose.msra.mxu0 0.0
    %402 = vmatprep.subr.mxu0 0.0
    %403 = vmatpush1.xpose.msra.mxu0 0.0
    %404 = vmatprep.subr.mxu0 0.0
    %405 = vmatpush1.xpose.msra.mxu0 0.0
    %406 = vmatprep.subr.mxu0 0.0
    %407 = vmatpush1.xpose.msra.mxu0 0.0
    %408 = vmatprep.subr.mxu0 0.0
    %409 = vmatpush1.xpose.msra.mxu0 0.0
    %410 = vmatprep.subr.mxu0 0.0
    %411 = vmatpush1.xpose.msra.mxu0 0.0
    %412 = vmatprep.subr.mxu0 0.0
    %413 = vmatpush1.xpose.msra.mxu0 0.0
    %414 = vmatprep.subr.mxu0 0.0
    %415 = vmatpush1.xpose.msra.mxu0 0.0
    %416 = vmatprep.subr.mxu0 0.0
    %417 = vmatpush1.xpose.msra.mxu0 0.0
    %418 = vmatprep.subr.mxu0 0.0
    %419 = vmatpush1.xpose.msra.mxu0 0.0
    %420 = vmatprep.subr.mxu0 0.0
    %421 = vmatpush1.xpose.msra.mxu0 0.0
    %422 = vmatprep.subr.mxu0 0.0
    %423 = vmatpush1.xpose.msra.mxu0 0.0
    %424 = vmatprep.subr.mxu0 0.0
    %425 = vmatpush1.xpose.msra.mxu0 0.0
    %426 = vmatprep.subr.mxu0 0.0
    %427 = vmatpush1.xpose.msra.mxu0 0.0
    %428 = vmatprep.subr.mxu0 0.0
    %429 = vmatpush1.xpose.msra.mxu0 0.0
    %430 = vmatprep.subr.mxu0 0.0
    %431 = vmatpush1.xpose.msra.mxu0 0.0
    %432 = vmatprep.subr.mxu0 0.0
    %433 = vmatpush1.xpose.msra.mxu0 0.0
    %434 = vmatprep.subr.mxu0 0.0
    %435 = vmatpush1.xpose.msra.mxu0 0.0
    %436 = vmatprep.subr.mxu0 0.0
    %437 = vmatpush1.xpose.msra.mxu0 0.0
    %438 = vmatprep.subr.mxu0 0.0
    %439 = vmatpush1.xpose.msra.mxu0 0.0
    %440 = vmatprep.subr.mxu0 0.0
    %441 = vmatpush1.xpose.msra.mxu0 0.0
    %442 = vmatprep.mubr.f32.mxu0 0.0
    %443 = vmatmul.mubr.f32.gmra.mrb[0].mxu0 %v373
    %v444 = vpop.f32.mrb[0].mxu0
    %v445 = vadd.f32 %v33, %v444
    %v446 = vpop.f32.mrb[0].mxu0
    %447 = vdwg.mxu0
    %vm448 = vcmask 64512
    %v449 = vsel %vm448, %v369, -inf
    %450 = vmax.xlane.f32.xlu0 %v449
    %v451 = vpop.xlane.xlu0 %450
    %v452 = vsel %vm448, %v445, -inf
    %453 = vmax.xlane.f32.xlu0 %v452
    %v454 = vpop.xlane.xlu0 %453
    %v455 = vsub.f32 %v369, %v451
    %v456 = vsub.f32 %v445, %v454
    %v457 = vmul.f32 %v455, 1.442695
    %v458 = vpow.pop %v457
    %v459 = vmul.f32 %v456, 1.442695
    %v460 = vpow.pop %v459
    %v461 = vsel %vm448, %v458, 0.0
    %462 = vadd.xlane.f32.xlu0 %v461
    %v463 = vpop.xlane.xlu0 %462
    %v464 = vsel %vm448, %v460, 0.0
    %465 = vadd.xlane.f32.xlu0 %v464
    %v466 = vpop.xlane.xlu0 %465
    %v467 = vrcp.pop %v463
    %v468 = vmul.f32 %v458, %v467
    %v469 = vrcp.pop %v466
    %v470 = vmul.f32 %v460, %v469
    %471 = vst.msk [vmem:[#allocation4] sm:$0xff] %vm448, %v468
    %472 = vst.msk [vmem:[#allocation4 + $0x8] sm:$0xff] %vm448, %v470
    %v474 = vsel %vm448, %v468, 0
    %476 = vmatprep.subr.mxu0 0.0
    %477 = vmatpush1.msra.mxu0 %v287
    %478 = vmatprep.subr.mxu0 0.0
    %479 = vmatpush1.msra.mxu0 0.0
    %480 = vmatprep.subr.mxu0 0.0
    %481 = vmatpush1.msra.mxu0 0.0
    %482 = vmatprep.subr.mxu0 0.0
    %483 = vmatpush1.msra.mxu0 0.0
    %484 = vmatprep.subr.mxu0 0.0
    %485 = vmatpush1.msra.mxu0 0.0
    %486 = vmatprep.subr.mxu0 0.0
    %487 = vmatpush1.msra.mxu0 0.0
    %488 = vmatprep.subr.mxu0 0.0
    %489 = vmatpush1.msra.mxu0 0.0
    %490 = vmatprep.subr.mxu0 0.0
    %491 = vmatpush1.msra.mxu0 0.0
    %492 = vmatprep.subr.mxu0 0.0
    %493 = vmatpush1.msra.mxu0 0.0
    %494 = vmatprep.subr.mxu0 0.0
    %495 = vmatpush1.msra.mxu0 0.0
    %496 = vmatprep.subr.mxu0 0.0
    %497 = vmatpush1.msra.mxu0 0.0
    %498 = vmatprep.subr.mxu0 0.0
    %499 = vmatpush1.msra.mxu0 0.0
    %500 = vmatprep.subr.mxu0 0.0
    %501 = vmatpush1.msra.mxu0 0.0
    %502 = vmatprep.subr.mxu0 0.0
    %503 = vmatpush1.msra.mxu0 0.0
    %504 = vmatprep.subr.mxu0 0.0
    %505 = vmatpush1.msra.mxu0 0.0
    %506 = vmatprep.subr.mxu0 0.0
    %507 = vmatpush1.msra.mxu0 0.0
    %508 = vmatprep.subr.mxu0 0.0
    %509 = vmatpush1.msra.mxu0 0.0
    %510 = vmatprep.subr.mxu0 0.0
    %511 = vmatpush1.msra.mxu0 0.0
    %512 = vmatprep.subr.mxu0 0.0
    %513 = vmatpush1.msra.mxu0 0.0
    %514 = vmatprep.subr.mxu0 0.0
    %515 = vmatpush1.msra.mxu0 0.0
    %516 = vmatprep.subr.mxu0 0.0
    %517 = vmatpush1.msra.mxu0 0.0
    %518 = vmatprep.subr.mxu0 0.0
    %519 = vmatpush1.msra.mxu0 0.0
    %520 = vmatprep.subr.mxu0 0.0
    %521 = vmatpush1.msra.mxu0 0.0
    %522 = vmatprep.subr.mxu0 0.0
    %523 = vmatpush1.msra.mxu0 0.0
    %524 = vmatprep.subr.mxu0 0.0
    %525 = vmatpush1.msra.mxu0 0.0
    %526 = vmatprep.subr.mxu0 0.0
    %527 = vmatpush1.msra.mxu0 0.0
    %528 = vmatprep.subr.mxu0 0.0
    %529 = vmatpush1.msra.mxu0 0.0
    %530 = vmatprep.subr.mxu0 0.0
    %531 = vmatpush1.msra.mxu0 0.0
    %532 = vmatprep.subr.mxu0 0.0
    %533 = vmatpush1.msra.mxu0 0.0
    %534 = vmatprep.subr.mxu0 0.0
    %535 = vmatpush1.msra.mxu0 0.0
    %536 = vmatprep.subr.mxu0 0.0
    %537 = vmatpush1.msra.mxu0 0.0
    %538 = vmatprep.subr.mxu0 0.0
    %539 = vmatpush1.msra.mxu0 0.0
    %540 = vmatprep.mubr.f32.mxu0 0.0
    %541 = vmatmul.mubr.f32.gmra.mrb[0].mxu0 %v474
    %v542 = vpop.f32.mrb[0].mxu0
    %v543 = vadd.f32 0.0, %v542
    %v544 = vpop.f32.mrb[0].mxu0
    %545 = vdwg.mxu0
    %v547 = vsel %vm448, %v470, 0
    %549 = vmatprep.subr.mxu0 0.0
    %550 = vmatpush1.msra.mxu0 %v292
    %551 = vmatprep.subr.mxu0 0.0
    %552 = vmatpush1.msra.mxu0 0.0
    %553 = vmatprep.subr.mxu0 0.0
    %554 = vmatpush1.msra.mxu0 0.0
    %555 = vmatprep.subr.mxu0 0.0
    %556 = vmatpush1.msra.mxu0 0.0
    %557 = vmatprep.subr.mxu0 0.0
    %558 = vmatpush1.msra.mxu0 0.0
    %559 = vmatprep.subr.mxu0 0.0
    %560 = vmatpush1.msra.mxu0 0.0
    %561 = vmatprep.subr.mxu0 0.0
    %562 = vmatpush1.msra.mxu0 0.0
    %563 = vmatprep.subr.mxu0 0.0
    %564 = vmatpush1.msra.mxu0 0.0
    %565 = vmatprep.subr.mxu0 0.0
    %566 = vmatpush1.msra.mxu0 0.0
    %567 = vmatprep.subr.mxu0 0.0
    %568 = vmatpush1.msra.mxu0 0.0
    %569 = vmatprep.subr.mxu0 0.0
    %570 = vmatpush1.msra.mxu0 0.0
    %571 = vmatprep.subr.mxu0 0.0
    %572 = vmatpush1.msra.mxu0 0.0
    %573 = vmatprep.subr.mxu0 0.0
    %574 = vmatpush1.msra.mxu0 0.0
    %575 = vmatprep.subr.mxu0 0.0
    %576 = vmatpush1.msra.mxu0 0.0
    %577 = vmatprep.subr.mxu0 0.0
    %578 = vmatpush1.msra.mxu0 0.0
    %579 = vmatprep.subr.mxu0 0.0
    %580 = vmatpush1.msra.mxu0 0.0
    %581 = vmatprep.subr.mxu0 0.0
    %582 = vmatpush1.msra.mxu0 0.0
    %583 = vmatprep.subr.mxu0 0.0
    %584 = vmatpush1.msra.mxu0 0.0
    %585 = vmatprep.subr.mxu0 0.0
    %586 = vmatpush1.msra.mxu0 0.0
    %587 = vmatprep.subr.mxu0 0.0
    %588 = vmatpush1.msra.mxu0 0.0
    %589 = vmatprep.subr.mxu0 0.0
    %590 = vmatpush1.msra.mxu0 0.0
    %591 = vmatprep.subr.mxu0 0.0
    %592 = vmatpush1.msra.mxu0 0.0
    %593 = vmatprep.subr.mxu0 0.0
    %594 = vmatpush1.msra.mxu0 0.0
    %595 = vmatprep.subr.mxu0 0.0
    %596 = vmatpush1.msra.mxu0 0.0
    %597 = vmatprep.subr.mxu0 0.0
    %598 = vmatpush1.msra.mxu0 0.0
    %599 = vmatprep.subr.mxu0 0.0
    %600 = vmatpush1.msra.mxu0 0.0
    %601 = vmatprep.subr.mxu0 0.0
    %602 = vmatpush1.msra.mxu0 0.0
    %603 = vmatprep.subr.mxu0 0.0
    %604 = vmatpush1.msra.mxu0 0.0
    %605 = vmatprep.subr.mxu0 0.0
    %606 = vmatpush1.msra.mxu0 0.0
    %607 = vmatprep.subr.mxu0 0.0
    %608 = vmatpush1.msra.mxu0 0.0
    %609 = vmatprep.subr.mxu0 0.0
    %610 = vmatpush1.msra.mxu0 0.0
    %611 = vmatprep.subr.mxu0 0.0
    %612 = vmatpush1.msra.mxu0 0.0
    %613 = vmatprep.mubr.f32.mxu0 0.0
    %614 = vmatmul.mubr.f32.gmra.mrb[0].mxu0 %v547
    %v615 = vpop.f32.mrb[0].mxu0
    %v616 = vadd.f32 0.0, %v615
    %v617 = vpop.f32.mrb[0].mxu0
    %618 = vdwg.mxu0
    %v619 = vld [vmem:[%s3] sm:$0xff]
    %v620 = vld [vmem:[%s3 + $0x8] sm:$0xff]
    %v621 = vld [vmem:[%s6 + $0x1] sm:$0x1]
    %v622 = vld [vmem:[%s6 + $0x3] sm:$0x1]
    %v623 = vld [vmem:[%s6 + $0x5] sm:$0x1]
    %s624 = scalar_lea.vmem %s2, 32
    %v625 = vld [vmem:[%s624] sm:$0xff]
    %v626 = vld [vmem:[%s624 + $0x8] sm:$0xff]
    %v627 = vld [vmem:[%s624 + $0x10] sm:$0xff]
    %v628 = vld [vmem:[%s624 + $0x18] sm:$0xff]
    %v629 = vlaneseq
    %v630 = vshrl.u32 %v629, 7
    %v631 = vsub.s32 0, %v630
    %v632 = vrot.slane %v621, %v631
    %633 = vmatprep.subr.mxu0 0.0
    %634 = vmatpush1.msra.mxu0 %v625
    %635 = vmatprep.subr.mxu0 0.0
    %636 = vmatpush1.msra.mxu0 %v626
    %637 = vmatprep.subr.mxu0 0.0
    %638 = vmatpush1.msra.mxu0 %v627
    %639 = vmatprep.subr.mxu0 0.0
    %640 = vmatpush1.msra.mxu0 %v628
    %641 = vmatprep.subr.mxu0 0.0
    %642 = vmatpush1.msra.mxu0 0.0
    %643 = vmatprep.subr.mxu0 0.0
    %644 = vmatpush1.msra.mxu0 0.0
    %645 = vmatprep.subr.mxu0 0.0
    %646 = vmatpush1.msra.mxu0 0.0
    %647 = vmatprep.subr.mxu0 0.0
    %648 = vmatpush1.msra.mxu0 0.0
    %649 = vmatprep.subr.mxu0 0.0
    %650 = vmatpush1.msra.mxu0 0.0
    %651 = vmatprep.subr.mxu0 0.0
    %652 = vmatpush1.msra.mxu0 0.0
    %653 = vmatprep.subr.mxu0 0.0
    %654 = vmatpush1.msra.mxu0 0.0
    %655 = vmatprep.subr.mxu0 0.0
    %656 = vmatpush1.msra.mxu0 0.0
    %657 = vmatprep.subr.mxu0 0.0
    %658 = vmatpush1.msra.mxu0 0.0
    %659 = vmatprep.subr.mxu0 0.0
    %660 = vmatpush1.msra.mxu0 0.0
    %661 = vmatprep.subr.mxu0 0.0
    %662 = vmatpush1.msra.mxu0 0.0
    %663 = vmatprep.subr.mxu0 0.0
    %664 = vmatpush1.msra.mxu0 0.0
    %665 = vmatprep.subr.mxu0 0.0
    %666 = vmatpush1.msra.mxu0 0.0
    %667 = vmatprep.subr.mxu0 0.0
    %668 = vmatpush1.msra.mxu0 0.0
    %669 = vmatprep.subr.mxu0 0.0
    %670 = vmatpush1.msra.mxu0 0.0
    %671 = vmatprep.subr.mxu0 0.0
    %672 = vmatpush1.msra.mxu0 0.0
    %673 = vmatprep.subr.mxu0 0.0
    %674 = vmatpush1.msra.mxu0 0.0
    %675 = vmatprep.subr.mxu0 0.0
    %676 = vmatpush1.msra.mxu0 0.0
    %677 = vmatprep.subr.mxu0 0.0
    %678 = vmatpush1.msra.mxu0 0.0
    %679 = vmatprep.subr.mxu0 0.0
    %680 = vmatpush1.msra.mxu0 0.0
    %681 = vmatprep.subr.mxu0 0.0
    %682 = vmatpush1.msra.mxu0 0.0
    %683 = vmatprep.subr.mxu0 0.0
    %684 = vmatpush1.msra.mxu0 0.0
    %685 = vmatprep.subr.mxu0 0.0
    %686 = vmatpush1.msra.mxu0 0.0
    %687 = vmatprep.subr.mxu0 0.0
    %688 = vmatpush1.msra.mxu0 0.0
    %689 = vmatprep.subr.mxu0 0.0
    %690 = vmatpush1.msra.mxu0 0.0
    %691 = vmatprep.subr.mxu0 0.0
    %692 = vmatpush1.msra.mxu0 0.0
    %693 = vmatprep.subr.mxu0 0.0
    %694 = vmatpush1.msra.mxu0 0.0
    %695 = vmatprep.subr.mxu0 0.0
    %696 = vmatpush1.msra.mxu0 0.0
    %697 = vmatprep.mubr.f32.mxu0 0.0
    %698 = vmatmul.mubr.f32.gmra.mrb[0].mxu0 %v47
    %v699 = vpop.f32.mrb[0].mxu0
    %v700 = vadd.f32 %v632, %v699
    %v701 = vpop.f32.mrb[0].mxu0
    %702 = vmatprep.mubr.f32.mxu0 0.0
    %703 = vmatmul.mubr.f32.gmra.mrb[0].mxu0 %v50
    %v704 = vpop.f32.mrb[0].mxu0
    %v705 = vadd.f32 %v632, %v704
    %v706 = vpop.f32.mrb[0].mxu0
    %707 = vdwg.mxu0
    %s708 = scalar_lea.vmem %s2, 96
    %v709 = vld [vmem:[%s708] sm:$0xff]
    %v710 = vld [vmem:[%s708 + $0x8] sm:$0xff]
    %v711 = vld [vmem:[%s708 + $0x10] sm:$0xff]
    %v712 = vld [vmem:[%s708 + $0x18] sm:$0xff]
    %v713 = vlaneseq
    %v714 = vshrl.u32 %v713, 7
    %v715 = vsub.s32 0, %v714
    %v716 = vrot.slane %v622, %v715
    %717 = vmatprep.subr.mxu0 0.0
    %718 = vmatpush1.msra.mxu0 %v709
    %719 = vmatprep.subr.mxu0 0.0
    %720 = vmatpush1.msra.mxu0 %v710
    %721 = vmatprep.subr.mxu0 0.0
    %722 = vmatpush1.msra.mxu0 %v711
    %723 = vmatprep.subr.mxu0 0.0
    %724 = vmatpush1.msra.mxu0 %v712
    %725 = vmatprep.subr.mxu0 0.0
    %726 = vmatpush1.msra.mxu0 0.0
    %727 = vmatprep.subr.mxu0 0.0
    %728 = vmatpush1.msra.mxu0 0.0
    %729 = vmatprep.subr.mxu0 0.0
    %730 = vmatpush1.msra.mxu0 0.0
    %731 = vmatprep.subr.mxu0 0.0
    %732 = vmatpush1.msra.mxu0 0.0
    %733 = vmatprep.subr.mxu0 0.0
    %734 = vmatpush1.msra.mxu0 0.0
    %735 = vmatprep.subr.mxu0 0.0
    %736 = vmatpush1.msra.mxu0 0.0
    %737 = vmatprep.subr.mxu0 0.0
    %738 = vmatpush1.msra.mxu0 0.0
    %739 = vmatprep.subr.mxu0 0.0
    %740 = vmatpush1.msra.mxu0 0.0
    %741 = vmatprep.subr.mxu0 0.0
    %742 = vmatpush1.msra.mxu0 0.0
    %743 = vmatprep.subr.mxu0 0.0
    %744 = vmatpush1.msra.mxu0 0.0
    %745 = vmatprep.subr.mxu0 0.0
    %746 = vmatpush1.msra.mxu0 0.0
    %747 = vmatprep.subr.mxu0 0.0
    %748 = vmatpush1.msra.mxu0 0.0
    %749 = vmatprep.subr.mxu0 0.0
    %750 = vmatpush1.msra.mxu0 0.0
    %751 = vmatprep.subr.mxu0 0.0
    %752 = vmatpush1.msra.mxu0 0.0
    %753 = vmatprep.subr.mxu0 0.0
    %754 = vmatpush1.msra.mxu0 0.0
    %755 = vmatprep.subr.mxu0 0.0
    %756 = vmatpush1.msra.mxu0 0.0
    %757 = vmatprep.subr.mxu0 0.0
    %758 = vmatpush1.msra.mxu0 0.0
    %759 = vmatprep.subr.mxu0 0.0
    %760 = vmatpush1.msra.mxu0 0.0
    %761 = vmatprep.subr.mxu0 0.0
    %762 = vmatpush1.msra.mxu0 0.0
    %763 = vmatprep.subr.mxu0 0.0
    %764 = vmatpush1.msra.mxu0 0.0
    %765 = vmatprep.subr.mxu0 0.0
    %766 = vmatpush1.msra.mxu0 0.0
    %767 = vmatprep.subr.mxu0 0.0
    %768 = vmatpush1.msra.mxu0 0.0
    %769 = vmatprep.subr.mxu0 0.0
    %770 = vmatpush1.msra.mxu0 0.0
    %771 = vmatprep.subr.mxu0 0.0
    %772 = vmatpush1.msra.mxu0 0.0
    %773 = vmatprep.subr.mxu0 0.0
    %774 = vmatpush1.msra.mxu0 0.0
    %775 = vmatprep.subr.mxu0 0.0
    %776 = vmatpush1.msra.mxu0 0.0
    %777 = vmatprep.subr.mxu0 0.0
    %778 = vmatpush1.msra.mxu0 0.0
    %779 = vmatprep.subr.mxu0 0.0
    %780 = vmatpush1.msra.mxu0 0.0
    %781 = vmatprep.mubr.f32.mxu0 0.0
    %782 = vmatmul.mubr.f32.gmra.mrb[0].mxu0 %v47
    %v783 = vpop.f32.mrb[0].mxu0
    %v784 = vadd.f32 %v716, %v783
    %v785 = vpop.f32.mrb[0].mxu0
    %786 = vmatprep.mubr.f32.mxu0 0.0
    %787 = vmatmul.mubr.f32.gmra.mrb[0].mxu0 %v50
    %v788 = vpop.f32.mrb[0].mxu0
    %v789 = vadd.f32 %v716, %v788
    %v790 = vpop.f32.mrb[0].mxu0
    %791 = vdwg.mxu0
    %s792 = scalar_lea.vmem %s2, 160
    %v793 = vld [vmem:[%s792] sm:$0xff]
    %v794 = vld [vmem:[%s792 + $0x8] sm:$0xff]
    %v795 = vld [vmem:[%s792 + $0x10] sm:$0xff]
    %v796 = vld [vmem:[%s792 + $0x18] sm:$0xff]
    %v797 = vlaneseq
    %v798 = vshrl.u32 %v797, 7
    %v799 = vsub.s32 0, %v798
    %v800 = vrot.slane %v623, %v799
    %801 = vmatprep.subr.mxu0 0.0
    %802 = vmatpush1.msra.mxu0 %v793
    %803 = vmatprep.subr.mxu0 0.0
    %804 = vmatpush1.msra.mxu0 %v794
    %805 = vmatprep.subr.mxu0 0.0
    %806 = vmatpush1.msra.mxu0 %v795
    %807 = vmatprep.subr.mxu0 0.0
    %808 = vmatpush1.msra.mxu0 %v796
    %809 = vmatprep.subr.mxu0 0.0
    %810 = vmatpush1.msra.mxu0 0.0
    %811 = vmatprep.subr.mxu0 0.0
    %812 = vmatpush1.msra.mxu0 0.0
    %813 = vmatprep.subr.mxu0 0.0
    %814 = vmatpush1.msra.mxu0 0.0
    %815 = vmatprep.subr.mxu0 0.0
    %816 = vmatpush1.msra.mxu0 0.0
    %817 = vmatprep.subr.mxu0 0.0
    %818 = vmatpush1.msra.mxu0 0.0
    %819 = vmatprep.subr.mxu0 0.0
    %820 = vmatpush1.msra.mxu0 0.0
    %821 = vmatprep.subr.mxu0 0.0
    %822 = vmatpush1.msra.mxu0 0.0
    %823 = vmatprep.subr.mxu0 0.0
    %824 = vmatpush1.msra.mxu0 0.0
    %825 = vmatprep.subr.mxu0 0.0
    %826 = vmatpush1.msra.mxu0 0.0
    %827 = vmatprep.subr.mxu0 0.0
    %828 = vmatpush1.msra.mxu0 0.0
    %829 = vmatprep.subr.mxu0 0.0
    %830 = vmatpush1.msra.mxu0 0.0
    %831 = vmatprep.subr.mxu0 0.0
    %832 = vmatpush1.msra.mxu0 0.0
    %833 = vmatprep.subr.mxu0 0.0
    %834 = vmatpush1.msra.mxu0 0.0
    %835 = vmatprep.subr.mxu0 0.0
    %836 = vmatpush1.msra.mxu0 0.0
    %837 = vmatprep.subr.mxu0 0.0
    %838 = vmatpush1.msra.mxu0 0.0
    %839 = vmatprep.subr.mxu0 0.0
    %840 = vmatpush1.msra.mxu0 0.0
    %841 = vmatprep.subr.mxu0 0.0
    %842 = vmatpush1.msra.mxu0 0.0
    %843 = vmatprep.subr.mxu0 0.0
    %844 = vmatpush1.msra.mxu0 0.0
    %845 = vmatprep.subr.mxu0 0.0
    %846 = vmatpush1.msra.mxu0 0.0
    %847 = vmatprep.subr.mxu0 0.0
    %848 = vmatpush1.msra.mxu0 0.0
    %849 = vmatprep.subr.mxu0 0.0
    %850 = vmatpush1.msra.mxu0 0.0
    %851 = vmatprep.subr.mxu0 0.0
    %852 = vmatpush1.msra.mxu0 0.0
    %853 = vmatprep.subr.mxu0 0.0
    %854 = vmatpush1.msra.mxu0 0.0
    %855 = vmatprep.subr.mxu0 0.0
    %856 = vmatpush1.msra.mxu0 0.0
    %857 = vmatprep.subr.mxu0 0.0
    %858 = vmatpush1.msra.mxu0 0.0
    %859 = vmatprep.subr.mxu0 0.0
    %860 = vmatpush1.msra.mxu0 0.0
    %861 = vmatprep.subr.mxu0 0.0
    %862 = vmatpush1.msra.mxu0 0.0
    %863 = vmatprep.subr.mxu0 0.0
    %864 = vmatpush1.msra.mxu0 0.0
    %865 = vmatprep.mubr.f32.mxu0 0.0
    %866 = vmatmul.mubr.f32.gmra.mrb[0].mxu0 %v47
    %v867 = vpop.f32.mrb[0].mxu0
    %v868 = vadd.f32 %v800, %v867
    %v869 = vpop.f32.mrb[0].mxu0
    %870 = vmatprep.mubr.f32.mxu0 0.0
    %871 = vmatmul.mubr.f32.gmra.mrb[0].mxu0 %v50
    %v872 = vpop.f32.mrb[0].mxu0
    %v873 = vadd.f32 %v800, %v872
    %v874 = vpop.f32.mrb[0].mxu0
    %875 = vdwg.mxu0
    %v877 = vsel %vm295, %v700, 0
    %v880 = vsel %vm295, %v784, 0
    %882 = vmatprep.subr.mxu0 0.0
    %883 = vmatpush1.xpose.msra.mxu0 %v880
    %884 = vmatprep.subr.mxu0 0.0
    %885 = vmatpush1.xpose.msra.mxu0 0.0
    %886 = vmatprep.subr.mxu0 0.0
    %887 = vmatpush1.xpose.msra.mxu0 0.0
    %888 = vmatprep.subr.mxu0 0.0
    %889 = vmatpush1.xpose.msra.mxu0 0.0
    %890 = vmatprep.subr.mxu0 0.0
    %891 = vmatpush1.xpose.msra.mxu0 0.0
    %892 = vmatprep.subr.mxu0 0.0
    %893 = vmatpush1.xpose.msra.mxu0 0.0
    %894 = vmatprep.subr.mxu0 0.0
    %895 = vmatpush1.xpose.msra.mxu0 0.0
    %896 = vmatprep.subr.mxu0 0.0
    %897 = vmatpush1.xpose.msra.mxu0 0.0
    %898 = vmatprep.subr.mxu0 0.0
    %899 = vmatpush1.xpose.msra.mxu0 0.0
    %900 = vmatprep.subr.mxu0 0.0
    %901 = vmatpush1.xpose.msra.mxu0 0.0
    %902 = vmatprep.subr.mxu0 0.0
    %903 = vmatpush1.xpose.msra.mxu0 0.0
    %904 = vmatprep.subr.mxu0 0.0
    %905 = vmatpush1.xpose.msra.mxu0 0.0
    %906 = vmatprep.subr.mxu0 0.0
    %907 = vmatpush1.xpose.msra.mxu0 0.0
    %908 = vmatprep.subr.mxu0 0.0
    %909 = vmatpush1.xpose.msra.mxu0 0.0
    %910 = vmatprep.subr.mxu0 0.0
    %911 = vmatpush1.xpose.msra.mxu0 0.0
    %912 = vmatprep.subr.mxu0 0.0
    %913 = vmatpush1.xpose.msra.mxu0 0.0
    %914 = vmatprep.subr.mxu0 0.0
    %915 = vmatpush1.xpose.msra.mxu0 0.0
    %916 = vmatprep.subr.mxu0 0.0
    %917 = vmatpush1.xpose.msra.mxu0 0.0
    %918 = vmatprep.subr.mxu0 0.0
    %919 = vmatpush1.xpose.msra.mxu0 0.0
    %920 = vmatprep.subr.mxu0 0.0
    %921 = vmatpush1.xpose.msra.mxu0 0.0
    %922 = vmatprep.subr.mxu0 0.0
    %923 = vmatpush1.xpose.msra.mxu0 0.0
    %924 = vmatprep.subr.mxu0 0.0
    %925 = vmatpush1.xpose.msra.mxu0 0.0
    %926 = vmatprep.subr.mxu0 0.0
    %927 = vmatpush1.xpose.msra.mxu0 0.0
    %928 = vmatprep.subr.mxu0 0.0
    %929 = vmatpush1.xpose.msra.mxu0 0.0
    %930 = vmatprep.subr.mxu0 0.0
    %931 = vmatpush1.xpose.msra.mxu0 0.0
    %932 = vmatprep.subr.mxu0 0.0
    %933 = vmatpush1.xpose.msra.mxu0 0.0
    %934 = vmatprep.subr.mxu0 0.0
    %935 = vmatpush1.xpose.msra.mxu0 0.0
    %936 = vmatprep.subr.mxu0 0.0
    %937 = vmatpush1.xpose.msra.mxu0 0.0
    %938 = vmatprep.subr.mxu0 0.0
    %939 = vmatpush1.xpose.msra.mxu0 0.0
    %940 = vmatprep.subr.mxu0 0.0
    %941 = vmatpush1.xpose.msra.mxu0 0.0
    %942 = vmatprep.subr.mxu0 0.0
    %943 = vmatpush1.xpose.msra.mxu0 0.0
    %944 = vmatprep.subr.mxu0 0.0
    %945 = vmatpush1.xpose.msra.mxu0 0.0
    %946 = vmatprep.mubr.f32.mxu0 0.0
    %947 = vmatmul.mubr.f32.gmra.mrb[0].mxu0 %v877
    %v948 = vpop.f32.mrb[0].mxu0
    %v949 = vadd.f32 %v32, %v948
    %v950 = vpop.f32.mrb[0].mxu0
    %951 = vdwg.mxu0
    %v953 = vsel %vm295, %v705, 0
    %v956 = vsel %vm295, %v789, 0
    %958 = vmatprep.subr.mxu0 0.0
    %959 = vmatpush1.xpose.msra.mxu0 %v956
    %960 = vmatprep.subr.mxu0 0.0
    %961 = vmatpush1.xpose.msra.mxu0 0.0
    %962 = vmatprep.subr.mxu0 0.0
    %963 = vmatpush1.xpose.msra.mxu0 0.0
    %964 = vmatprep.subr.mxu0 0.0
    %965 = vmatpush1.xpose.msra.mxu0 0.0
    %966 = vmatprep.subr.mxu0 0.0
    %967 = vmatpush1.xpose.msra.mxu0 0.0
    %968 = vmatprep.subr.mxu0 0.0
    %969 = vmatpush1.xpose.msra.mxu0 0.0
    %970 = vmatprep.subr.mxu0 0.0
    %971 = vmatpush1.xpose.msra.mxu0 0.0
    %972 = vmatprep.subr.mxu0 0.0
    %973 = vmatpush1.xpose.msra.mxu0 0.0
    %974 = vmatprep.subr.mxu0 0.0
    %975 = vmatpush1.xpose.msra.mxu0 0.0
    %976 = vmatprep.subr.mxu0 0.0
    %977 = vmatpush1.xpose.msra.mxu0 0.0
    %978 = vmatprep.subr.mxu0 0.0
    %979 = vmatpush1.xpose.msra.mxu0 0.0
    %980 = vmatprep.subr.mxu0 0.0
    %981 = vmatpush1.xpose.msra.mxu0 0.0
    %982 = vmatprep.subr.mxu0 0.0
    %983 = vmatpush1.xpose.msra.mxu0 0.0
    %984 = vmatprep.subr.mxu0 0.0
    %985 = vmatpush1.xpose.msra.mxu0 0.0
    %986 = vmatprep.subr.mxu0 0.0
    %987 = vmatpush1.xpose.msra.mxu0 0.0
    %988 = vmatprep.subr.mxu0 0.0
    %989 = vmatpush1.xpose.msra.mxu0 0.0
    %990 = vmatprep.subr.mxu0 0.0
    %991 = vmatpush1.xpose.msra.mxu0 0.0
    %992 = vmatprep.subr.mxu0 0.0
    %993 = vmatpush1.xpose.msra.mxu0 0.0
    %994 = vmatprep.subr.mxu0 0.0
    %995 = vmatpush1.xpose.msra.mxu0 0.0
    %996 = vmatprep.subr.mxu0 0.0
    %997 = vmatpush1.xpose.msra.mxu0 0.0
    %998 = vmatprep.subr.mxu0 0.0
    %999 = vmatpush1.xpose.msra.mxu0 0.0
    %1000 = vmatprep.subr.mxu0 0.0
    %1001 = vmatpush1.xpose.msra.mxu0 0.0
    %1002 = vmatprep.subr.mxu0 0.0
    %1003 = vmatpush1.xpose.msra.mxu0 0.0
    %1004 = vmatprep.subr.mxu0 0.0
    %1005 = vmatpush1.xpose.msra.mxu0 0.0
    %1006 = vmatprep.subr.mxu0 0.0
    %1007 = vmatpush1.xpose.msra.mxu0 0.0
    %1008 = vmatprep.subr.mxu0 0.0
    %1009 = vmatpush1.xpose.msra.mxu0 0.0
    %1010 = vmatprep.subr.mxu0 0.0
    %1011 = vmatpush1.xpose.msra.mxu0 0.0
    %1012 = vmatprep.subr.mxu0 0.0
    %1013 = vmatpush1.xpose.msra.mxu0 0.0
    %1014 = vmatprep.subr.mxu0 0.0
    %1015 = vmatpush1.xpose.msra.mxu0 0.0
    %1016 = vmatprep.subr.mxu0 0.0
    %1017 = vmatpush1.xpose.msra.mxu0 0.0
    %1018 = vmatprep.subr.mxu0 0.0
    %1019 = vmatpush1.xpose.msra.mxu0 0.0
    %1020 = vmatprep.subr.mxu0 0.0
    %1021 = vmatpush1.xpose.msra.mxu0 0.0
    %1022 = vmatprep.mubr.f32.mxu0 0.0
    %1023 = vmatmul.mubr.f32.gmra.mrb[0].mxu0 %v953
    %v1024 = vpop.f32.mrb[0].mxu0
    %v1025 = vadd.f32 %v33, %v1024
    %v1026 = vpop.f32.mrb[0].mxu0
    %1027 = vdwg.mxu0
    %v1028 = vsel %vm448, %v949, -inf
    %1029 = vmax.xlane.f32.xlu0 %v1028
    %v1030 = vpop.xlane.xlu0 %1029
    %v1031 = vsel %vm448, %v1025, -inf
    %1032 = vmax.xlane.f32.xlu0 %v1031
    %v1033 = vpop.xlane.xlu0 %1032
    %v1034 = vsub.f32 %v949, %v1030
    %v1035 = vsub.f32 %v1025, %v1033
    %v1036 = vmul.f32 %v1034, 1.442695
    %v1037 = vpow.pop %v1036
    %v1038 = vmul.f32 %v1035, 1.442695
    %v1039 = vpow.pop %v1038
    %v1040 = vsel %vm448, %v1037, 0.0
    %1041 = vadd.xlane.f32.xlu0 %v1040
    %v1042 = vpop.xlane.xlu0 %1041
    %v1043 = vsel %vm448, %v1039, 0.0
    %1044 = vadd.xlane.f32.xlu0 %v1043
    %v1045 = vpop.xlane.xlu0 %1044
    %v1046 = vrcp.pop %v1042
    %v1047 = vmul.f32 %v1037, %v1046
    %v1048 = vrcp.pop %v1045
    %v1049 = vmul.f32 %v1039, %v1048
    %s1050 = scalar_lea.vmem [#allocation4], 16
    %1051 = vst.msk [vmem:[%s1050] sm:$0xff] %vm448, %v1047
    %1052 = vst.msk [vmem:[%s1050 + $0x8] sm:$0xff] %vm448, %v1049
    %v1054 = vsel %vm448, %v1047, 0
    %1056 = vmatprep.subr.mxu0 0.0
    %1057 = vmatpush1.msra.mxu0 %v868
    %1058 = vmatprep.subr.mxu0 0.0
    %1059 = vmatpush1.msra.mxu0 0.0
    %1060 = vmatprep.subr.mxu0 0.0
    %1061 = vmatpush1.msra.mxu0 0.0
    %1062 = vmatprep.subr.mxu0 0.0
    %1063 = vmatpush1.msra.mxu0 0.0
    %1064 = vmatprep.subr.mxu0 0.0
    %1065 = vmatpush1.msra.mxu0 0.0
    %1066 = vmatprep.subr.mxu0 0.0
    %1067 = vmatpush1.msra.mxu0 0.0
    %1068 = vmatprep.subr.mxu0 0.0
    %1069 = vmatpush1.msra.mxu0 0.0
    %1070 = vmatprep.subr.mxu0 0.0
    %1071 = vmatpush1.msra.mxu0 0.0
    %1072 = vmatprep.subr.mxu0 0.0
    %1073 = vmatpush1.msra.mxu0 0.0
    %1074 = vmatprep.subr.mxu0 0.0
    %1075 = vmatpush1.msra.mxu0 0.0
    %1076 = vmatprep.subr.mxu0 0.0
    %1077 = vmatpush1.msra.mxu0 0.0
    %1078 = vmatprep.subr.mxu0 0.0
    %1079 = vmatpush1.msra.mxu0 0.0
    %1080 = vmatprep.subr.mxu0 0.0
    %1081 = vmatpush1.msra.mxu0 0.0
    %1082 = vmatprep.subr.mxu0 0.0
    %1083 = vmatpush1.msra.mxu0 0.0
    %1084 = vmatprep.subr.mxu0 0.0
    %1085 = vmatpush1.msra.mxu0 0.0
    %1086 = vmatprep.subr.mxu0 0.0
    %1087 = vmatpush1.msra.mxu0 0.0
    %1088 = vmatprep.subr.mxu0 0.0
    %1089 = vmatpush1.msra.mxu0 0.0
    %1090 = vmatprep.subr.mxu0 0.0
    %1091 = vmatpush1.msra.mxu0 0.0
    %1092 = vmatprep.subr.mxu0 0.0
    %1093 = vmatpush1.msra.mxu0 0.0
    %1094 = vmatprep.subr.mxu0 0.0
    %1095 = vmatpush1.msra.mxu0 0.0
    %1096 = vmatprep.subr.mxu0 0.0
    %1097 = vmatpush1.msra.mxu0 0.0
    %1098 = vmatprep.subr.mxu0 0.0
    %1099 = vmatpush1.msra.mxu0 0.0
    %1100 = vmatprep.subr.mxu0 0.0
    %1101 = vmatpush1.msra.mxu0 0.0
    %1102 = vmatprep.subr.mxu0 0.0
    %1103 = vmatpush1.msra.mxu0 0.0
    %1104 = vmatprep.subr.mxu0 0.0
    %1105 = vmatpush1.msra.mxu0 0.0
    %1106 = vmatprep.subr.mxu0 0.0
    %1107 = vmatpush1.msra.mxu0 0.0
    %1108 = vmatprep.subr.mxu0 0.0
    %1109 = vmatpush1.msra.mxu0 0.0
    %1110 = vmatprep.subr.mxu0 0.0
    %1111 = vmatpush1.msra.mxu0 0.0
    %1112 = vmatprep.subr.mxu0 0.0
    %1113 = vmatpush1.msra.mxu0 0.0
    %1114 = vmatprep.subr.mxu0 0.0
    %1115 = vmatpush1.msra.mxu0 0.0
    %1116 = vmatprep.subr.mxu0 0.0
    %1117 = vmatpush1.msra.mxu0 0.0
    %1118 = vmatprep.subr.mxu0 0.0
    %1119 = vmatpush1.msra.mxu0 0.0
    %1120 = vmatprep.mubr.f32.mxu0 0.0
    %1121 = vmatmul.mubr.f32.gmra.mrb[0].mxu0 %v1054
    %v1122 = vpop.f32.mrb[0].mxu0
    %v1123 = vadd.f32 0.0, %v1122
    %v1124 = vpop.f32.mrb[0].mxu0
    %1125 = vdwg.mxu0
    %v1127 = vsel %vm448, %v1049, 0
    %1129 = vmatprep.subr.mxu0 0.0
    %1130 = vmatpush1.msra.mxu0 %v873
    %1131 = vmatprep.subr.mxu0 0.0
    %1132 = vmatpush1.msra.mxu0 0.0
    %1133 = vmatprep.subr.mxu0 0.0
    %1134 = vmatpush1.msra.mxu0 0.0
    %1135 = vmatprep.subr.mxu0 0.0
    %1136 = vmatpush1.msra.mxu0 0.0
    %1137 = vmatprep.subr.mxu0 0.0
    %1138 = vmatpush1.msra.mxu0 0.0
    %1139 = vmatprep.subr.mxu0 0.0
    %1140 = vmatpush1.msra.mxu0 0.0
    %1141 = vmatprep.subr.mxu0 0.0
    %1142 = vmatpush1.msra.mxu0 0.0
    %1143 = vmatprep.subr.mxu0 0.0
    %1144 = vmatpush1.msra.mxu0 0.0
    %1145 = vmatprep.subr.mxu0 0.0
    %1146 = vmatpush1.msra.mxu0 0.0
    %1147 = vmatprep.subr.mxu0 0.0
    %1148 = vmatpush1.msra.mxu0 0.0
    %1149 = vmatprep.subr.mxu0 0.0
    %1150 = vmatpush1.msra.mxu0 0.0
    %1151 = vmatprep.subr.mxu0 0.0
    %1152 = vmatpush1.msra.mxu0 0.0
    %1153 = vmatprep.subr.mxu0 0.0
    %1154 = vmatpush1.msra.mxu0 0.0
    %1155 = vmatprep.subr.mxu0 0.0
    %1156 = vmatpush1.msra.mxu0 0.0
    %1157 = vmatprep.subr.mxu0 0.0
    %1158 = vmatpush1.msra.mxu0 0.0
    %1159 = vmatprep.subr.mxu0 0.0
    %1160 = vmatpush1.msra.mxu0 0.0
    %1161 = vmatprep.subr.mxu0 0.0
    %1162 = vmatpush1.msra.mxu0 0.0
    %1163 = vmatprep.subr.mxu0 0.0
    %1164 = vmatpush1.msra.mxu0 0.0
    %1165 = vmatprep.subr.mxu0 0.0
    %1166 = vmatpush1.msra.mxu0 0.0
    %1167 = vmatprep.subr.mxu0 0.0
    %1168 = vmatpush1.msra.mxu0 0.0
    %1169 = vmatprep.subr.mxu0 0.0
    %1170 = vmatpush1.msra.mxu0 0.0
    %1171 = vmatprep.subr.mxu0 0.0
    %1172 = vmatpush1.msra.mxu0 0.0
    %1173 = vmatprep.subr.mxu0 0.0
    %1174 = vmatpush1.msra.mxu0 0.0
    %1175 = vmatprep.subr.mxu0 0.0
    %1176 = vmatpush1.msra.mxu0 0.0
    %1177 = vmatprep.subr.mxu0 0.0
    %1178 = vmatpush1.msra.mxu0 0.0
    %1179 = vmatprep.subr.mxu0 0.0
    %1180 = vmatpush1.msra.mxu0 0.0
    %1181 = vmatprep.subr.mxu0 0.0
    %1182 = vmatpush1.msra.mxu0 0.0
    %1183 = vmatprep.subr.mxu0 0.0
    %1184 = vmatpush1.msra.mxu0 0.0
    %1185 = vmatprep.subr.mxu0 0.0
    %1186 = vmatpush1.msra.mxu0 0.0
    %1187 = vmatprep.subr.mxu0 0.0
    %1188 = vmatpush1.msra.mxu0 0.0
    %1189 = vmatprep.subr.mxu0 0.0
    %1190 = vmatpush1.msra.mxu0 0.0
    %1191 = vmatprep.subr.mxu0 0.0
    %1192 = vmatpush1.msra.mxu0 0.0
    %1193 = vmatprep.mubr.f32.mxu0 0.0
    %1194 = vmatmul.mubr.f32.gmra.mrb[0].mxu0 %v1127
    %v1195 = vpop.f32.mrb[0].mxu0
    %v1196 = vadd.f32 0.0, %v1195
    %v1197 = vpop.f32.mrb[0].mxu0
    %1198 = vdwg.mxu0
    %v1199 = vld [vmem:[%s3 + $0x10] sm:$0xff]
    %v1200 = vld [vmem:[%s3 + $0x18] sm:$0xff]
    %v1202 = vsel %vm295, %v1123, 0
    %v1205 = vsel %vm295, %v1196, 0
    %1207 = vmatprep.subr.mxu0 0.0
    %1208 = vmatpush1.msra.mxu0 %v1199
    %1209 = vmatprep.subr.mxu0 0.0
    %1210 = vmatpush1.msra.mxu0 %v1200
    %1211 = vmatprep.subr.mxu0 0.0
    %1212 = vmatpush1.msra.mxu0 0.0
    %1213 = vmatprep.subr.mxu0 0.0
    %1214 = vmatpush1.msra.mxu0 0.0
    %1215 = vmatprep.subr.mxu0 0.0
    %1216 = vmatpush1.msra.mxu0 0.0
    %1217 = vmatprep.subr.mxu0 0.0
    %1218 = vmatpush1.msra.mxu0 0.0
    %1219 = vmatprep.subr.mxu0 0.0
    %1220 = vmatpush1.msra.mxu0 0.0
    %1221 = vmatprep.subr.mxu0 0.0
    %1222 = vmatpush1.msra.mxu0 0.0
    %1223 = vmatprep.subr.mxu0 0.0
    %1224 = vmatpush1.msra.mxu0 0.0
    %1225 = vmatprep.subr.mxu0 0.0
    %1226 = vmatpush1.msra.mxu0 0.0
    %1227 = vmatprep.subr.mxu0 0.0
    %1228 = vmatpush1.msra.mxu0 0.0
    %1229 = vmatprep.subr.mxu0 0.0
    %1230 = vmatpush1.msra.mxu0 0.0
    %1231 = vmatprep.subr.mxu0 0.0
    %1232 = vmatpush1.msra.mxu0 0.0
    %1233 = vmatprep.subr.mxu0 0.0
    %1234 = vmatpush1.msra.mxu0 0.0
    %1235 = vmatprep.subr.mxu0 0.0
    %1236 = vmatpush1.msra.mxu0 0.0
    %1237 = vmatprep.subr.mxu0 0.0
    %1238 = vmatpush1.msra.mxu0 0.0
    %1239 = vmatprep.subr.mxu0 0.0
    %1240 = vmatpush1.msra.mxu0 0.0
    %1241 = vmatprep.subr.mxu0 0.0
    %1242 = vmatpush1.msra.mxu0 0.0
    %1243 = vmatprep.subr.mxu0 0.0
    %1244 = vmatpush1.msra.mxu0 0.0
    %1245 = vmatprep.subr.mxu0 0.0
    %1246 = vmatpush1.msra.mxu0 0.0
    %1247 = vmatprep.subr.mxu0 0.0
    %1248 = vmatpush1.msra.mxu0 0.0
    %1249 = vmatprep.subr.mxu0 0.0
    %1250 = vmatpush1.msra.mxu0 0.0
    %1251 = vmatprep.subr.mxu0 0.0
    %1252 = vmatpush1.msra.mxu0 0.0
    %1253 = vmatprep.subr.mxu0 0.0
    %1254 = vmatpush1.msra.mxu0 0.0
    %1255 = vmatprep.subr.mxu0 0.0
    %1256 = vmatpush1.msra.mxu0 0.0
    %1257 = vmatprep.subr.mxu0 0.0
    %1258 = vmatpush1.msra.mxu0 0.0
    %1259 = vmatprep.subr.mxu0 0.0
    %1260 = vmatpush1.msra.mxu0 0.0
    %1261 = vmatprep.subr.mxu0 0.0
    %1262 = vmatpush1.msra.mxu0 0.0
    %1263 = vmatprep.subr.mxu0 0.0
    %1264 = vmatpush1.msra.mxu0 0.0
    %1265 = vmatprep.subr.mxu0 0.0
    %1266 = vmatpush1.msra.mxu0 0.0
    %1267 = vmatprep.subr.mxu0 0.0
    %1268 = vmatpush1.msra.mxu0 0.0
    %1269 = vmatprep.subr.mxu0 0.0
    %1270 = vmatpush1.msra.mxu0 0.0
    %1271 = vmatprep.mubr.f32.mxu0 0.0
    %1272 = vmatmul.mubr.f32.gmra.mrb[0].mxu0 %v1202
    %v1273 = vpop.f32.mrb[0].mxu0
    %v1274 = vadd.f32 0.0, %v1273
    %v1275 = vpop.f32.mrb[0].mxu0
    %1276 = vmatprep.mubr.f32.mxu0 0.0
    %1277 = vmatmul.mubr.f32.gmra.mrb[0].mxu0 %v1205
    %v1278 = vpop.f32.mrb[0].mxu0
    %v1279 = vadd.f32 0.0, %v1278
    %v1280 = vpop.f32.mrb[0].mxu0
    %1281 = vdwg.mxu0
    %v1283 = vsel %vm295, %v543, 0
    %v1286 = vsel %vm295, %v616, 0
    %1288 = vmatprep.subr.mxu0 0.0
    %1289 = vmatpush1.msra.mxu0 %v619
    %1290 = vmatprep.subr.mxu0 0.0
    %1291 = vmatpush1.msra.mxu0 %v620
    %1292 = vmatprep.subr.mxu0 0.0
    %1293 = vmatpush1.msra.mxu0 0.0
    %1294 = vmatprep.subr.mxu0 0.0
    %1295 = vmatpush1.msra.mxu0 0.0
    %1296 = vmatprep.subr.mxu0 0.0
    %1297 = vmatpush1.msra.mxu0 0.0
    %1298 = vmatprep.subr.mxu0 0.0
    %1299 = vmatpush1.msra.mxu0 0.0
    %1300 = vmatprep.subr.mxu0 0.0
    %1301 = vmatpush1.msra.mxu0 0.0
    %1302 = vmatprep.subr.mxu0 0.0
    %1303 = vmatpush1.msra.mxu0 0.0
    %1304 = vmatprep.subr.mxu0 0.0
    %1305 = vmatpush1.msra.mxu0 0.0
    %1306 = vmatprep.subr.mxu0 0.0
    %1307 = vmatpush1.msra.mxu0 0.0
    %1308 = vmatprep.subr.mxu0 0.0
    %1309 = vmatpush1.msra.mxu0 0.0
    %1310 = vmatprep.subr.mxu0 0.0
    %1311 = vmatpush1.msra.mxu0 0.0
    %1312 = vmatprep.subr.mxu0 0.0
    %1313 = vmatpush1.msra.mxu0 0.0
    %1314 = vmatprep.subr.mxu0 0.0
    %1315 = vmatpush1.msra.mxu0 0.0
    %1316 = vmatprep.subr.mxu0 0.0
    %1317 = vmatpush1.msra.mxu0 0.0
    %1318 = vmatprep.subr.mxu0 0.0
    %1319 = vmatpush1.msra.mxu0 0.0
    %1320 = vmatprep.subr.mxu0 0.0
    %1321 = vmatpush1.msra.mxu0 0.0
    %1322 = vmatprep.subr.mxu0 0.0
    %1323 = vmatpush1.msra.mxu0 0.0
    %1324 = vmatprep.subr.mxu0 0.0
    %1325 = vmatpush1.msra.mxu0 0.0
    %1326 = vmatprep.subr.mxu0 0.0
    %1327 = vmatpush1.msra.mxu0 0.0
    %1328 = vmatprep.subr.mxu0 0.0
    %1329 = vmatpush1.msra.mxu0 0.0
    %1330 = vmatprep.subr.mxu0 0.0
    %1331 = vmatpush1.msra.mxu0 0.0
    %1332 = vmatprep.subr.mxu0 0.0
    %1333 = vmatpush1.msra.mxu0 0.0
    %1334 = vmatprep.subr.mxu0 0.0
    %1335 = vmatpush1.msra.mxu0 0.0
    %1336 = vmatprep.subr.mxu0 0.0
    %1337 = vmatpush1.msra.mxu0 0.0
    %1338 = vmatprep.subr.mxu0 0.0
    %1339 = vmatpush1.msra.mxu0 0.0
    %1340 = vmatprep.subr.mxu0 0.0
    %1341 = vmatpush1.msra.mxu0 0.0
    %1342 = vmatprep.subr.mxu0 0.0
    %1343 = vmatpush1.msra.mxu0 0.0
    %1344 = vmatprep.subr.mxu0 0.0
    %1345 = vmatpush1.msra.mxu0 0.0
    %1346 = vmatprep.subr.mxu0 0.0
    %1347 = vmatpush1.msra.mxu0 0.0
    %1348 = vmatprep.subr.mxu0 0.0
    %1349 = vmatpush1.msra.mxu0 0.0
    %1350 = vmatprep.subr.mxu0 0.0
    %1351 = vmatpush1.msra.mxu0 0.0
    %1352 = vmatprep.mubr.f32.mxu0 0.0
    %1353 = vmatmul.mubr.f32.gmra.mrb[0].mxu0 %v1283
    %v1354 = vpop.f32.mrb[0].mxu0
    %v1355 = vadd.f32 %v1274, %v1354
    %v1356 = vpop.f32.mrb[0].mxu0
    %1357 = vmatprep.mubr.f32.mxu0 0.0
    %1358 = vmatmul.mubr.f32.gmra.mrb[0].mxu0 %v1286
    %v1359 = vpop.f32.mrb[0].mxu0
    %v1360 = vadd.f32 %v1279, %v1359
    %v1361 = vpop.f32.mrb[0].mxu0
    %1362 = vdwg.mxu0
    %v1363 = vld [vmem:[%s6 + $0x6] sm:$0x1]
    %v1364 = vld [vmem:[%s6 + $0x7] sm:$0x1]
    %v1365 = vld [vmem:[%s6 + $0x8] sm:$0x1]
    %v1366 = vlaneseq
    %v1367 = vshrl.u32 %v1366, 7
    %v1368 = vsub.s32 0, %v1367
    %v1369 = vrot.slane %v1363, %v1368
    %v1370 = vadd.f32 %v1355, %v1369
    %v1371 = vadd.f32 %v1360, %v1369
    %v1372 = vadd.f32 %v1370, %v30
    %v1373 = vadd.f32 %v1371, %v31
    %v1374 = vsel %vm45, %v1372, 0.0
    %1375 = vadd.xlane.f32.xlu0 %v1374
    %v1376 = vpop.xlane.xlu0 %1375
    %v1377 = vsel %vm45, %v1373, 0.0
    %1378 = vadd.xlane.f32.xlu0 %v1377
    %v1379 = vpop.xlane.xlu0 %1378
    %v1380 = vrcp.pop 32.0
    %v1381 = vmul.f32 %v1376, %v1380
    %v1382 = vmul.f32 %v1379, %v1380
    %v1383 = vsub.f32 %v1372, %v1381
    %v1384 = vsub.f32 %v1373, %v1382
    %v1385 = vmul.f32 %v1383, %v1383
    %v1386 = vmul.f32 %v1384, %v1384
    %v1387 = vsel %vm45, %v1385, 0.0
    %1388 = vadd.xlane.f32.xlu0 %v1387
    %v1389 = vpop.xlane.xlu0 %1388
    %v1390 = vsel %vm45, %v1386, 0.0
    %1391 = vadd.xlane.f32.xlu0 %v1390
    %v1392 = vpop.xlane.xlu0 %1391
    %v1393 = vmul.f32 %v1389, %v1380
    %v1394 = vmul.f32 %v1392, %v1380
    %v1395 = vadd.f32 %v1393, 1e-05
    %v1396 = vadd.f32 %v1394, 1e-05
    %v1397 = vrsqrt.pop %v1395
    %v1398 = vrsqrt.pop %v1396
    %v1399 = vmul.f32 %v1383, %v1397
    %v1400 = vmul.f32 %v1384, %v1398
    %v1401 = vlaneseq
    %v1402 = vshrl.u32 %v1401, 7
    %v1403 = vsub.s32 0, %v1402
    %v1404 = vrot.slane %v1364, %v1403
    %v1405 = vmul.f32 %v1399, %v1404
    %v1406 = vmul.f32 %v1400, %v1404
    %v1407 = vlaneseq
    %v1408 = vshrl.u32 %v1407, 7
    %v1409 = vsub.s32 0, %v1408
    %v1410 = vrot.slane %v1365, %v1409
    %v1411 = vadd.f32 %v1405, %v1410
    %v1412 = vadd.f32 %v1406, %v1410
    %v1413 = vld [vmem:[%s6 + $0x9] sm:$0x1]
    %v1414 = vld [vmem:[%s6 + $0xa] sm:$0x1]
    %v1415 = vld [vmem:[%s4] sm:$0xff]
    %v1416 = vld [vmem:[%s4 + $0x8] sm:$0xff]
    %v1417 = vld [vmem:[%s4 + $0x10] sm:$0xff]
    %v1418 = vld [vmem:[%s4 + $0x18] sm:$0xff]
    %v1419 = vlaneseq
    %v1420 = vshrl.u32 %v1419, 7
    %v1421 = vsub.s32 0, %v1420
    %v1422 = vrot.slane %v1413, %v1421
    %v1424 = vsel %vm45, %v1411, 0
    %v1427 = vsel %vm45, %v1412, 0
    %1429 = vmatprep.subr.mxu0 0.0
    %1430 = vmatpush1.msra.mxu0 %v1415
    %1431 = vmatprep.subr.mxu0 0.0
    %1432 = vmatpush1.msra.mxu0 %v1416
    %1433 = vmatprep.subr.mxu0 0.0
    %1434 = vmatpush1.msra.mxu0 %v1417
    %1435 = vmatprep.subr.mxu0 0.0
    %1436 = vmatpush1.msra.mxu0 %v1418
    %1437 = vmatprep.subr.mxu0 0.0
    %1438 = vmatpush1.msra.mxu0 0.0
    %1439 = vmatprep.subr.mxu0 0.0
    %1440 = vmatpush1.msra.mxu0 0.0
    %1441 = vmatprep.subr.mxu0 0.0
    %1442 = vmatpush1.msra.mxu0 0.0
    %1443 = vmatprep.subr.mxu0 0.0
    %1444 = vmatpush1.msra.mxu0 0.0
    %1445 = vmatprep.subr.mxu0 0.0
    %1446 = vmatpush1.msra.mxu0 0.0
    %1447 = vmatprep.subr.mxu0 0.0
    %1448 = vmatpush1.msra.mxu0 0.0
    %1449 = vmatprep.subr.mxu0 0.0
    %1450 = vmatpush1.msra.mxu0 0.0
    %1451 = vmatprep.subr.mxu0 0.0
    %1452 = vmatpush1.msra.mxu0 0.0
    %1453 = vmatprep.subr.mxu0 0.0
    %1454 = vmatpush1.msra.mxu0 0.0
    %1455 = vmatprep.subr.mxu0 0.0
    %1456 = vmatpush1.msra.mxu0 0.0
    %1457 = vmatprep.subr.mxu0 0.0
    %1458 = vmatpush1.msra.mxu0 0.0
    %1459 = vmatprep.subr.mxu0 0.0
    %1460 = vmatpush1.msra.mxu0 0.0
    %1461 = vmatprep.subr.mxu0 0.0
    %1462 = vmatpush1.msra.mxu0 0.0
    %1463 = vmatprep.subr.mxu0 0.0
    %1464 = vmatpush1.msra.mxu0 0.0
    %1465 = vmatprep.subr.mxu0 0.0
    %1466 = vmatpush1.msra.mxu0 0.0
    %1467 = vmatprep.subr.mxu0 0.0
    %1468 = vmatpush1.msra.mxu0 0.0
    %1469 = vmatprep.subr.mxu0 0.0
    %1470 = vmatpush1.msra.mxu0 0.0
    %1471 = vmatprep.subr.mxu0 0.0
    %1472 = vmatpush1.msra.mxu0 0.0
    %1473 = vmatprep.subr.mxu0 0.0
    %1474 = vmatpush1.msra.mxu0 0.0
    %1475 = vmatprep.subr.mxu0 0.0
    %1476 = vmatpush1.msra.mxu0 0.0
    %1477 = vmatprep.subr.mxu0 0.0
    %1478 = vmatpush1.msra.mxu0 0.0
    %1479 = vmatprep.subr.mxu0 0.0
    %1480 = vmatpush1.msra.mxu0 0.0
    %1481 = vmatprep.subr.mxu0 0.0
    %1482 = vmatpush1.msra.mxu0 0.0
    %1483 = vmatprep.subr.mxu0 0.0
    %1484 = vmatpush1.msra.mxu0 0.0
    %1485 = vmatprep.subr.mxu0 0.0
    %1486 = vmatpush1.msra.mxu0 0.0
    %1487 = vmatprep.subr.mxu0 0.0
    %1488 = vmatpush1.msra.mxu0 0.0
    %1489 = vmatprep.subr.mxu0 0.0
    %1490 = vmatpush1.msra.mxu0 0.0
    %1491 = vmatprep.subr.mxu0 0.0
    %1492 = vmatpush1.msra.mxu0 0.0
    %1493 = vmatprep.mubr.f32.mxu0 0.0
    %1494 = vmatmul.mubr.f32.gmra.mrb[0].mxu0 %v1424
    %v1495 = vpop.f32.mrb[0].mxu0
    %v1496 = vadd.f32 %v1422, %v1495
    %v1497 = vpop.f32.mrb[0].mxu0
    %1498 = vmatprep.mubr.f32.mxu0 0.0
    %1499 = vmatmul.mubr.f32.gmra.mrb[0].mxu0 %v1427
    %v1500 = vpop.f32.mrb[0].mxu0
    %v1501 = vadd.f32 %v1422, %v1500
    %v1502 = vpop.f32.mrb[0].mxu0
    %1503 = vdwg.mxu0
    %v1504 = vmul.f32 %v1496, 0.5
    %v1505 = vmul.f32 %v1501, 0.5
    %v1506 = vmul.f32 %v1496, 0.70710677
    %v1507 = vmul.f32 %v1501, 0.70710677
    %v1508 = vand.u32 2147483647, %v1506
    %v1509 = vand.u32 2147483647, %v1507
    %v1510 = vmul.f32 %v1508, 0.3275911
    %v1511 = vmul.f32 %v1509, 0.3275911
    %v1512 = vadd.f32 %v1510, 1.0
    %v1513 = vadd.f32 %v1511, 1.0
    %v1514 = vrcp.pop %v1512
    %v1515 = vmul.f32 1.0, %v1514
    %v1516 = vrcp.pop %v1513
    %v1517 = vmul.f32 1.0, %v1516
    %v1518 = vmul.f32 %v1515, 1.0614054
    %v1519 = vmul.f32 %v1517, 1.0614054
    %v1520 = vadd.f32 %v1518, -1.4531521
    %v1521 = vadd.f32 %v1519, -1.4531521
    %v1522 = vmul.f32 %v1520, %v1515
    %v1523 = vmul.f32 %v1521, %v1517
    %v1524 = vadd.f32 %v1522, 1.4214138
    %v1525 = vadd.f32 %v1523, 1.4214138
    %v1526 = vmul.f32 %v1524, %v1515
    %v1527 = vmul.f32 %v1525, %v1517
    %v1528 = vadd.f32 %v1526, -0.28449672
    %v1529 = vadd.f32 %v1527, -0.28449672
    %v1530 = vmul.f32 %v1528, %v1515
    %v1531 = vmul.f32 %v1529, %v1517
    %v1532 = vadd.f32 %v1530, 0.2548296
    %v1533 = vadd.f32 %v1531, 0.2548296
    %v1534 = vmul.f32 %v1532, %v1515
    %v1535 = vmul.f32 %v1533, %v1517
    %v1536 = vsub.f32 0.0, %v1508
    %v1537 = vsub.f32 0.0, %v1509
    %v1538 = vmul.f32 %v1536, %v1508
    %v1539 = vmul.f32 %v1537, %v1509
    %v1540 = vmul.f32 %v1538, 1.442695
    %v1541 = vpow.pop %v1540
    %v1542 = vmul.f32 %v1539, 1.442695
    %v1543 = vpow.pop %v1542
    %v1544 = vmul.f32 %v1534, %v1541
    %v1545 = vmul.f32 %v1535, %v1543
    %v1546 = vsub.f32 1.0, %v1544
    %v1547 = vsub.f32 1.0, %v1545
    %vm1548 = vcmp.ge.f32.partialorder %v1506, 0.0
    %vm1549 = vcmp.ge.f32.partialorder %v1507, 0.0
    %v1550 = vsub.f32 0.0, %v1546
    %v1551 = vsub.f32 0.0, %v1547
    %v1552 = vsel %vm1548, %v1546, %v1550
    %v1553 = vsel %vm1549, %v1547, %v1551
    %v1554 = vadd.f32 %v1552, 1.0
    %v1555 = vadd.f32 %v1553, 1.0
    %v1556 = vmul.f32 %v1504, %v1554
    %v1557 = vmul.f32 %v1505, %v1555
    %v1558 = vld [vmem:[%s5] sm:$0xff]
    %v1559 = vld [vmem:[%s5 + $0x8] sm:$0xff]
    %v1560 = vld [vmem:[%s5 + $0x10] sm:$0xff]
    %v1561 = vld [vmem:[%s5 + $0x18] sm:$0xff]
    %v1562 = vld [vmem:[%s5 + $0x20] sm:$0xff]
    %v1563 = vld [vmem:[%s5 + $0x28] sm:$0xff]
    %v1564 = vld [vmem:[%s5 + $0x30] sm:$0xff]
    %v1565 = vld [vmem:[%s5 + $0x38] sm:$0xff]
    %v1566 = vld [vmem:[%s5 + $0x40] sm:$0xff]
    %v1567 = vld [vmem:[%s5 + $0x48] sm:$0xff]
    %v1568 = vld [vmem:[%s5 + $0x50] sm:$0xff]
    %v1569 = vld [vmem:[%s5 + $0x58] sm:$0xff]
    %v1570 = vld [vmem:[%s5 + $0x60] sm:$0xff]
    %v1571 = vld [vmem:[%s5 + $0x68] sm:$0xff]
    %v1572 = vld [vmem:[%s5 + $0x70] sm:$0xff]
    %v1573 = vld [vmem:[%s5 + $0x78] sm:$0xff]
    %v1574 = vlaneseq
    %v1575 = vshrl.u32 %v1574, 7
    %v1576 = vsub.s32 0, %v1575
    %v1577 = vrot.slane %v1414, %v1576
    %1578 = vmatprep.subr.mxu0 0.0
    %1579 = vmatpush1.msra.mxu0 %v1558
    %1580 = vmatprep.subr.mxu0 0.0
    %1581 = vmatpush1.msra.mxu0 %v1559
    %1582 = vmatprep.subr.mxu0 0.0
    %1583 = vmatpush1.msra.mxu0 %v1560
    %1584 = vmatprep.subr.mxu0 0.0
    %1585 = vmatpush1.msra.mxu0 %v1561
    %1586 = vmatprep.subr.mxu0 0.0
    %1587 = vmatpush1.msra.mxu0 %v1562
    %1588 = vmatprep.subr.mxu0 0.0
    %1589 = vmatpush1.msra.mxu0 %v1563
    %1590 = vmatprep.subr.mxu0 0.0
    %1591 = vmatpush1.msra.mxu0 %v1564
    %1592 = vmatprep.subr.mxu0 0.0
    %1593 = vmatpush1.msra.mxu0 %v1565
    %1594 = vmatprep.subr.mxu0 0.0
    %1595 = vmatpush1.msra.mxu0 %v1566
    %1596 = vmatprep.subr.mxu0 0.0
    %1597 = vmatpush1.msra.mxu0 %v1567
    %1598 = vmatprep.subr.mxu0 0.0
    %1599 = vmatpush1.msra.mxu0 %v1568
    %1600 = vmatprep.subr.mxu0 0.0
    %1601 = vmatpush1.msra.mxu0 %v1569
    %1602 = vmatprep.subr.mxu0 0.0
    %1603 = vmatpush1.msra.mxu0 %v1570
    %1604 = vmatprep.subr.mxu0 0.0
    %1605 = vmatpush1.msra.mxu0 %v1571
    %1606 = vmatprep.subr.mxu0 0.0
    %1607 = vmatpush1.msra.mxu0 %v1572
    %1608 = vmatprep.subr.mxu0 0.0
    %1609 = vmatpush1.msra.mxu0 %v1573
    %1610 = vmatprep.subr.mxu0 0.0
    %1611 = vmatpush1.msra.mxu0 0.0
    %1612 = vmatprep.subr.mxu0 0.0
    %1613 = vmatpush1.msra.mxu0 0.0
    %1614 = vmatprep.subr.mxu0 0.0
    %1615 = vmatpush1.msra.mxu0 0.0
    %1616 = vmatprep.subr.mxu0 0.0
    %1617 = vmatpush1.msra.mxu0 0.0
    %1618 = vmatprep.subr.mxu0 0.0
    %1619 = vmatpush1.msra.mxu0 0.0
    %1620 = vmatprep.subr.mxu0 0.0
    %1621 = vmatpush1.msra.mxu0 0.0
    %1622 = vmatprep.subr.mxu0 0.0
    %1623 = vmatpush1.msra.mxu0 0.0
    %1624 = vmatprep.subr.mxu0 0.0
    %1625 = vmatpush1.msra.mxu0 0.0
    %1626 = vmatprep.subr.mxu0 0.0
    %1627 = vmatpush1.msra.mxu0 0.0
    %1628 = vmatprep.subr.mxu0 0.0
    %1629 = vmatpush1.msra.mxu0 0.0
    %1630 = vmatprep.subr.mxu0 0.0
    %1631 = vmatpush1.msra.mxu0 0.0
    %1632 = vmatprep.subr.mxu0 0.0
    %1633 = vmatpush1.msra.mxu0 0.0
    %1634 = vmatprep.subr.mxu0 0.0
    %1635 = vmatpush1.msra.mxu0 0.0
    %1636 = vmatprep.subr.mxu0 0.0
    %1637 = vmatpush1.msra.mxu0 0.0
    %1638 = vmatprep.subr.mxu0 0.0
    %1639 = vmatpush1.msra.mxu0 0.0
    %1640 = vmatprep.subr.mxu0 0.0
    %1641 = vmatpush1.msra.mxu0 0.0
    %1642 = vmatprep.mubr.f32.mxu0 0.0
    %1643 = vmatmul.mubr.f32.gmra.mrb[0].mxu0 %v1556
    %v1644 = vpop.f32.mrb[0].mxu0
    %v1645 = vadd.f32 %v1577, %v1644
    %v1646 = vpop.f32.mrb[0].mxu0
    %1647 = vmatprep.mubr.f32.mxu0 0.0
    %1648 = vmatmul.mubr.f32.gmra.mrb[0].mxu0 %v1557
    %v1649 = vpop.f32.mrb[0].mxu0
    %v1650 = vadd.f32 %v1577, %v1649
    %v1651 = vpop.f32.mrb[0].mxu0
    %1652 = vdwg.mxu0
    %1653 = vst [vmem:[#allocation2] sm:$0xff] %v1645
    %1654 = vst [vmem:[#allocation2 + $0x8] sm:$0xff] %v1650
    // Predicated region
    $region30: #{tpu_custom_call.1} parent=1 // pred_check
      _
    $region31: #{tpu_custom_call.1} parent=1 // pred_check_branch
      %1656 = sbr.rel (0) target = $region33
    $region32: #{tpu_custom_call.1} parent=1 // pred_region
      %s1658 = ssub.s32 256, 256
      %1659 = vsyncadd [#allocation3], %s1658
      %s1660 = sshll.u32 [#allocation2], 4
      %s1661 = int_to_ptr.vmem [resolvable:$true] %s1660
      %1666 = dma.vmem_to_hbm [thread:$0]  %s1661, 256, %s7, [#allocation3], 128, 128, 8
    $region33: #{tpu_custom_call.1} parent=1 // pred_fallthru
      _
    // Predicated region
    $region34: #{tpu_custom_call.1} parent=1 // pred_check
      _
    $region35: #{tpu_custom_call.1} parent=1 // pred_check_branch
      %1668 = sbr.rel (0) target = $region37
    $region36: #{tpu_custom_call.1} parent=1 // pred_region
      %s1670 = ssub.s32 512, 512
      %1671 = vsyncadd [#allocation5], %s1670
      %s1672 = sshll.u32 [#allocation4], 4
      %s1673 = int_to_ptr.vmem [resolvable:$true] %s1672
      %1678 = dma.vmem_to_hbm [thread:$0]  %s1673, 512, %s8, [#allocation5], 128, 128, 8
    $region37: #{tpu_custom_call.1} parent=1 // pred_fallthru
      _
    // Predicated region
    $region38: #{tpu_custom_call.1} parent=1 // pred_check
      _
    $region39: #{tpu_custom_call.1} parent=1 // pred_check_branch
      %1680 = sbr.rel (0) target = $region41
    $region40: #{tpu_custom_call.1} parent=1 // pred_region
      %1681 = dma.done [#allocation3], 256
    $region41: #{tpu_custom_call.1} parent=1 // pred_fallthru
      _
    // Predicated region
    $region42: #{tpu_custom_call.1} parent=1 // pred_check
      _
    $region43: #{tpu_custom_call.1} parent=1 // pred_check_branch
      %1683 = sbr.rel (0) target = $region45
    $region44: #{tpu_custom_call.1} parent=1 // pred_region
      %1684 = dma.done [#allocation5], 512
    $region45: #{tpu_custom_call.1} parent=1 // pred_fallthru
      _
    %1685 = vsyncpa [#allocation3], 1
    %1686 = vsyncpa [#allocation5], 1

</llo_original>
